<compile_context>
chip_gen: v7x
topology: tpu7x:2x2x1
jax: 0.10.0
libtpu: 0.0.40
codegen_flags: <defaults>
</compile_context>

<pallas_src>
import functools

import jax
import jax.numpy as jnp
from jax.experimental import pallas as pl
from jax.experimental.pallas import tpu as pltpu

NEG = -1e30


# ----------------------------------------------------------------------------
# Pallas kernels
# ----------------------------------------------------------------------------

def _ln(x, g, b, eps=1e-12):
    m = jnp.mean(x, axis=-1, keepdims=True)
    v = jnp.mean((x - m) ** 2, axis=-1, keepdims=True)
    return (x - m) * jax.lax.rsqrt(v + eps) * g + b


def _softmax_rows(s):
    s = s - jnp.max(s, axis=-1, keepdims=True)
    p = jnp.exp(s)
    return p * pl.reciprocal(jnp.sum(p, axis=-1, keepdims=True), approx=True)


def encoder_kernel(x_ref, bias_ref,
                   w_in, b_in, wq, wk, wv, wo, ln1_g, ln1_b,
                   w1, b1, w2, b2, ln2_g, ln2_b,
                   out_ref):
    B, T, F = x_ref.shape
    D = w_in.shape[1]

    # input projection, all batches fused into one (B*T, F) matmul
    x2 = x_ref[...].reshape(B * T, F).astype(jnp.bfloat16)
    h = jnp.dot(x2, w_in[...], preferred_element_type=jnp.float32) + b_in[...]   # (B*T, D) f32
    hb = h.astype(jnp.bfloat16)

    # single-head self attention; padded key frames masked via additive bias
    q = jnp.dot(hb, wq[...], preferred_element_type=jnp.float32).reshape(B, T, D)
    k = jnp.dot(hb, wk[...], preferred_element_type=jnp.float32).reshape(B, T, D)
    v = jnp.dot(hb, wv[...], preferred_element_type=jnp.float32).reshape(B, T, D)
    scale = 1.0 / (D ** 0.5)
    s = jnp.einsum('bqd,bkd->bqk', q.astype(jnp.bfloat16), k.astype(jnp.bfloat16),
                   preferred_element_type=jnp.float32) * scale                    # (B, T, T)
    s = s + bias_ref[...][:, None, :]                                             # -1e9 on pad keys
    p = _softmax_rows(s)
    ctx = jnp.einsum('bqk,bkd->bqd', p.astype(jnp.bfloat16), v.astype(jnp.bfloat16),
                     preferred_element_type=jnp.float32).reshape(B * T, D)
    attn = jnp.dot(ctx.astype(jnp.bfloat16), wo[...], preferred_element_type=jnp.float32)
    h = _ln(h + attn, ln1_g[...], ln1_b[...])

    # feed-forward
    ff = jnp.maximum(jnp.dot(h.astype(jnp.bfloat16), w1[...],
                             preferred_element_type=jnp.float32) + b1[...], 0.0)
    ff = jnp.dot(ff.astype(jnp.bfloat16), w2[...],
                 preferred_element_type=jnp.float32) + b2[...]
    h = _ln(h + ff, ln2_g[...], ln2_b[...])
    out_ref[...] = h.reshape(B, T, D)


def ctc_kernel(x_ref, w_ref, b_ref, out_ref):
    B, T, D = x_ref.shape
    V = w_ref.shape[1]
    h = x_ref[...].reshape(B * T, D).astype(jnp.bfloat16)
    logits = jnp.dot(h, w_ref[...], preferred_element_type=jnp.float32) + b_ref[...]
    z = logits - jnp.max(logits, axis=-1, keepdims=True)
    lse = jnp.log(jnp.sum(jnp.exp(z), axis=-1, keepdims=True))
    out_ref[...] = (z - lse).reshape(B, T, V)                                      # log_softmax


def decoder_kernel(enc_ref, bias_ref, sem_ref,
                   we, be, wq, wk, wv, wo, ln1_g, ln1_b,
                   w1, b1, w2, b2, ln2_g, ln2_b, wout, bout,
                   out_ref):
    B, T, D = enc_ref.shape
    L, V = sem_ref.shape[1], sem_ref.shape[2]

    sem2 = sem_ref[...].reshape(B * L, V).astype(jnp.bfloat16)
    h = jnp.dot(sem2, we[...], preferred_element_type=jnp.float32) + be[...]       # (B*L, D)

    enc2 = enc_ref[...].reshape(B * T, D).astype(jnp.bfloat16)
    q = jnp.dot(h.astype(jnp.bfloat16), wq[...],
                preferred_element_type=jnp.float32).reshape(B, L, D)
    k = jnp.dot(enc2, wk[...], preferred_element_type=jnp.float32).reshape(B, T, D)
    v = jnp.dot(enc2, wv[...], preferred_element_type=jnp.float32).reshape(B, T, D)
    scale = 1.0 / (D ** 0.5)
    s = jnp.einsum('bqd,bkd->bqk', q.astype(jnp.bfloat16), k.astype(jnp.bfloat16),
                   preferred_element_type=jnp.float32) * scale                     # (B, L, T)
    s = s + bias_ref[...][:, None, :]                                              # mask enc padding
    p = _softmax_rows(s)
    ctx = jnp.einsum('bqk,bkd->bqd', p.astype(jnp.bfloat16), v.astype(jnp.bfloat16),
                     preferred_element_type=jnp.float32).reshape(B * L, D)
    h = _ln(h + jnp.dot(ctx.astype(jnp.bfloat16), wo[...],
                        preferred_element_type=jnp.float32), ln1_g[...], ln1_b[...])

    ff = jnp.maximum(jnp.dot(h.astype(jnp.bfloat16), w1[...],
                             preferred_element_type=jnp.float32) + b1[...], 0.0)
    ff = jnp.dot(ff.astype(jnp.bfloat16), w2[...],
                 preferred_element_type=jnp.float32) + b2[...]
    h = _ln(h + ff, ln2_g[...], ln2_b[...])

    logits = jnp.dot(h.astype(jnp.bfloat16), wout[...],
                     preferred_element_type=jnp.float32) + bout[...]
    out_ref[...] = logits.reshape(B, L, V)


def ce_kernel(logits_ref, onehot_ref, out_ref):
    # label-smoothing CE with smoothing = 0.0; targets already masked (padded rows all-zero)
    logits = logits_ref[...]
    z = logits - jnp.max(logits, axis=-1, keepdims=True)
    lse = jnp.log(jnp.sum(jnp.exp(z), axis=-1, keepdims=True))
    logp = z - lse
    out_ref[0, 0] = -jnp.sum(onehot_ref[...] * logp)


# ----------------------------------------------------------------------------
# Wrappers (single-step pallas_call; full arrays live in VMEM, loaded once)
# ----------------------------------------------------------------------------

ENC_KEYS = ["w_in", "b_in", "wq", "wk", "wv", "wo", "ln1_g", "ln1_b",
            "w1", "b1", "w2", "b2", "ln2_g", "ln2_b"]
DEC_KEYS = ["we", "be", "dwq", "dwk", "dwv", "dwo", "dln1_g", "dln1_b",
            "dw1", "db1", "dw2", "db2", "dln2_g", "dln2_b", "wout", "bout"]


def run_encoder(speech, key_bias, params):
    B, T, _ = speech.shape
    D = params["w_in"].shape[1]
    weights = [params[k] for k in ENC_KEYS]
    return pl.pallas_call(
        encoder_kernel,
        out_shape=jax.ShapeDtypeStruct((B, T, D), jnp.float32),
    )(speech, key_bias, *weights)


def run_ctc_logsoftmax(enc_out, w_ctc, b_ctc):
    B, T, _ = enc_out.shape
    V = w_ctc.shape[1]
    return pl.pallas_call(
        ctc_kernel,
        out_shape=jax.ShapeDtypeStruct((B, T, V), jnp.float32),
    )(enc_out, w_ctc, b_ctc)


def run_decoder(enc_out, enc_key_bias, sem_embeds, params):
    B, _, _ = enc_out.shape
    L, V = sem_embeds.shape[1], sem_embeds.shape[2]
    weights = [params[k] for k in DEC_KEYS]
    return pl.pallas_call(
        decoder_kernel,
        out_shape=jax.ShapeDtypeStruct((B, L, V), jnp.float32),
    )(enc_out, enc_key_bias, sem_embeds, *weights)


def run_ce(dec_logits, onehot):
    out = pl.pallas_call(
        ce_kernel,
        in_specs=[pl.BlockSpec(memory_space=pltpu.MemorySpace.VMEM),
                  pl.BlockSpec(memory_space=pltpu.MemorySpace.VMEM)],
        out_specs=pl.BlockSpec(memory_space=pltpu.MemorySpace.SMEM),
        out_shape=jax.ShapeDtypeStruct((1, 1), jnp.float32),
    )(dec_logits, onehot)
    return out[0, 0]


# ----------------------------------------------------------------------------
# Device-side CTC dynamic programs (plain JAX lax.scan; no Pallas equivalent,
# but on-device to avoid the host round-trip between CTC and decoder stages)
# ----------------------------------------------------------------------------

def _expand_labels(labels, blank):
    umax = labels.shape[0]
    s_idx = jnp.arange(2 * umax + 1)
    is_lab = (s_idx % 2) == 1
    lab_pos = jnp.clip((s_idx - 1) // 2, 0, umax - 1)
    exp_lab = jnp.where(is_lab, labels[lab_pos], blank)
    return s_idx, exp_lab


def ctc_forward_nll(logp, t_len, labels, u_len, blank):
    tmax = logp.shape[0]
    s_idx, exp_lab = _expand_labels(labels, blank)
    s_eff = 2 * u_len + 1
    state_valid = s_idx < s_eff
    emit = logp[:, exp_lab]                                        # (Tmax, S)
    prev2 = jnp.concatenate([jnp.full((2,), -1, exp_lab.dtype), exp_lab[:-2]])
    skip_ok = (s_idx >= 2) & (exp_lab != blank) & (exp_lab != prev2)

    alpha0 = jnp.where(s_idx == 0, emit[0, 0],
                       jnp.where(s_idx == 1, emit[0, 1], NEG))
    alpha0 = jnp.where(state_valid, alpha0, NEG)
    neg1 = jnp.full((1,), NEG, jnp.float32)
    neg2 = jnp.full((2,), NEG, jnp.float32)

    def step(alpha, t):
        a1 = jnp.concatenate([neg1, alpha[:-1]])
        a2 = jnp.concatenate([neg2, alpha[:-2]])
        a = jnp.logaddexp(alpha, a1)
        a = jnp.where(skip_ok, jnp.logaddexp(a, a2), a)
        new = jnp.where(state_valid, a + emit[t], NEG)
        return jnp.where(t < t_len, new, alpha), None

    alpha, _ = jax.lax.scan(step, alpha0, jnp.arange(1, tmax))
    ll = jnp.logaddexp(alpha[s_eff - 1], alpha[s_eff - 2])
    return -ll


def ctc_viterbi_align(logp, t_len, labels, u_len, blank):
    tmax = logp.shape[0]
    s_idx, exp_lab = _expand_labels(labels, blank)
    s_eff = 2 * u_len + 1
    state_valid = s_idx < s_eff
    emit = logp[:, exp_lab]
    prev2 = jnp.concatenate([jnp.full((2,), -1, exp_lab.dtype), exp_lab[:-2]])
    skip_ok = (s_idx >= 2) & (exp_lab != blank) & (exp_lab != prev2)

    alpha0 = jnp.where(s_idx == 0, emit[0, 0],
                       jnp.where(s_idx == 1, emit[0, 1], NEG))
    alpha0 = jnp.where(state_valid, alpha0, NEG)
    neg1 = jnp.full((1,), NEG, jnp.float32)
    neg2 = jnp.full((2,), NEG, jnp.float32)

    def step(alpha, t):
        a1 = jnp.concatenate([neg1, alpha[:-1]])
        a2 = jnp.where(skip_ok, jnp.concatenate([neg2, alpha[:-2]]), NEG)
        cands = jnp.stack([alpha, a1, a2], axis=0)                 # order: stay, s-1, s-2
        best = jnp.argmax(cands, axis=0)
        val = jnp.max(cands, axis=0)
        new = jnp.where(state_valid, val + emit[t], NEG)
        take = t < t_len
        alpha_next = jnp.where(take, new, alpha)
        bp = jnp.where(take, s_idx - best, s_idx)                  # identity bp on padded frames
        return alpha_next, bp

    alpha, bps = jax.lax.scan(step, alpha0, jnp.arange(1, tmax))   # (Tmax-1, S)
    final = jnp.where(alpha[s_eff - 2] > alpha[s_eff - 1], s_eff - 2, s_eff - 1)

    def back(state, bp_t):
        return bp_t[state], state

    state0, states_tail = jax.lax.scan(back, final, bps, reverse=True)
    states = jnp.concatenate([state0[None], states_tail])
    return exp_lab[states]                                         # (Tmax,) aligned tokens


def compress_alignment(logp, align, t_len, out_len, blank):
    # average frame posteriors per run of identical alignment tokens, drop blank runs
    tmax, v = logp.shape
    t_idx = jnp.arange(tmax)
    valid = t_idx < t_len
    prev = jnp.concatenate([jnp.full((1,), -1, align.dtype), align[:-1]])
    new_run = valid & ((t_idx == 0) | (align != prev))
    run_id = jnp.cumsum(new_run.astype(jnp.int32)) - 1
    run_id = jnp.where(valid, run_id, tmax)                        # OOB -> dropped

    run_sum = jnp.zeros((tmax, v), jnp.float32).at[run_id].add(
        jnp.where(valid[:, None], logp, 0.0), mode="drop")
    run_cnt = jnp.zeros((tmax,), jnp.float32).at[run_id].add(
        valid.astype(jnp.float32), mode="drop")
    run_tok = jnp.zeros((tmax,), jnp.int32).at[run_id].add(
        jnp.where(new_run, align, 0).astype(jnp.int32), mode="drop")

    run_valid = run_cnt > 0
    run_mean = run_sum / jnp.maximum(run_cnt, 1.0)[:, None]
    nonblank = run_valid & (run_tok != blank)
    pos = jnp.cumsum(nonblank.astype(jnp.int32)) - 1
    out_idx = jnp.where(nonblank, pos, out_len + tmax)             # OOB -> dropped
    comp = jnp.zeros((out_len, v), jnp.float32).at[out_idx].add(
        jnp.where(nonblank[:, None], run_mean, 0.0), mode="drop")
    return comp


@functools.partial(jax.jit, static_argnames=("blank", "out_len"))
def ctc_loss_and_compress(logp, in_lens, labels, label_lens, blank, out_len):
    nll = jax.vmap(lambda a, b, c, d: ctc_forward_nll(a, b, c, d, blank))(
        logp, in_lens, labels, label_lens)
    align = jax.vmap(lambda a, b, c, d: ctc_viterbi_align(a, b, c, d, blank))(
        logp, in_lens, labels, label_lens)
    comp = jax.vmap(lambda a, b, c: compress_alignment(a, b, c, out_len, blank))(
        logp, align, in_lens)
    return jnp.sum(nll) / logp.shape[0], comp


# ----------------------------------------------------------------------------
# Main
# ----------------------------------------------------------------------------

if __name__ == "__main__":
    # lane-dense example hyperparameters (D, DFF, V multiples of 128)
    B, T, F = 2, 16, 80          # batch, speech frames, input_size (fbank dims)
    D, DFF, V = 128, 256, 128    # encoder dim, ffn dim, vocab_size
    Lmax = 8                     # max text length (multiple of 8 for sublane-clean reshapes)
    blank_id, ignore_id = 0, -1
    ctc_weight = 0.5

    key = jax.random.PRNGKey(0)
    keys = list(jax.random.split(key, 32))
    kit = iter(keys)

    def w_bf16(shape, scale=0.1):
        return (scale * jax.random.normal(next(kit), shape, jnp.float32)).astype(jnp.bfloat16)

    params = {
        # encoder
        "w_in": w_bf16((F, D)), "b_in": jnp.zeros((1, D), jnp.float32),
        "wq": w_bf16((D, D)), "wk": w_bf16((D, D)), "wv": w_bf16((D, D)), "wo": w_bf16((D, D)),
        "ln1_g": jnp.ones((1, D), jnp.float32), "ln1_b": jnp.zeros((1, D), jnp.float32),
        "w1": w_bf16((D, DFF)), "b1": jnp.zeros((1, DFF), jnp.float32),
        "w2": w_bf16((DFF, D)), "b2": jnp.zeros((1, D), jnp.float32),
        "ln2_g": jnp.ones((1, D), jnp.float32), "ln2_b": jnp.zeros((1, D), jnp.float32),
        # ctc head
        "w_ctc": w_bf16((D, V)), "b_ctc": jnp.zeros((1, V), jnp.float32),
        # decoder
        "we": w_bf16((V, D)), "be": jnp.zeros((1, D), jnp.float32),
        "dwq": w_bf16((D, D)), "dwk": w_bf16((D, D)), "dwv": w_bf16((D, D)), "dwo": w_bf16((D, D)),
        "dln1_g": jnp.ones((1, D), jnp.float32), "dln1_b": jnp.zeros((1, D), jnp.float32),
        "dw1": w_bf16((D, DFF)), "db1": jnp.zeros((1, DFF), jnp.float32),
        "dw2": w_bf16((DFF, D)), "db2": jnp.zeros((1, D), jnp.float32),
        "dln2_g": jnp.ones((1, D), jnp.float32), "dln2_b": jnp.zeros((1, D), jnp.float32),
        "wout": w_bf16((D, V)), "bout": jnp.zeros((1, V), jnp.float32),
    }

    speech = jax.random.normal(next(kit), (B, T, F), jnp.float32)
    speech_lengths = jnp.array([16, 12], jnp.int32)
    # deterministic labels with no adjacent repeats (keeps CTC alignment feasible)
    text = ((jnp.arange(Lmax)[None, :] * 7 + jnp.arange(B)[:, None] * 11) % (V - 3) + 3).astype(jnp.int32)
    text_lengths = jnp.array([6, 5], jnp.int32)
    tok_mask = jnp.arange(Lmax)[None, :] < text_lengths[:, None]
    ys_pad = jnp.where(tok_mask, text, ignore_id)

    # additive key-padding bias for attention: 0 on valid frames, -1e9 on padding
    frame_valid = (jnp.arange(T)[None, :] < speech_lengths[:, None]).astype(jnp.float32)   # (B, T)
    key_bias = (1.0 - frame_valid) * (-1e9)

    # --- encode (Pallas) ---
    encoder_out = run_encoder(speech, key_bias, params)
    encoder_out_lens = speech_lengths

    # --- CTC branch: log_softmax (Pallas) + loss / forced-alignment compression (device lax.scan) ---
    ctc_logp = run_ctc_logsoftmax(encoder_out, params["w_ctc"], params["b_ctc"])
    loss_ctc, compressed_ctc = ctc_loss_and_compress(
        ctc_logp, encoder_out_lens, text, text_lengths, blank=blank_id, out_len=Lmax)

    # --- attention branch: decoder (Pallas) + label-smoothing CE (Pallas) ---
    dec_logits = run_decoder(encoder_out, key_bias, compressed_ctc, params)
    onehot = jax.nn.one_hot(jnp.where(ys_pad >= 0, ys_pad, 0), V, dtype=jnp.float32)
    onehot = onehot * tok_mask[..., None].astype(jnp.float32)
    loss_att = run_ce(dec_logits, onehot) / B

    pred = jnp.argmax(dec_logits, axis=-1)
    acc_att = jnp.sum(jnp.where(tok_mask, pred == ys_pad, False)) / jnp.sum(tok_mask)

    loss = ctc_weight * loss_ctc + (1.0 - ctc_weight) * loss_att

    jax.block_until_ready((loss, loss_ctc, loss_att, acc_att, dec_logits))
    print("KERNEL_OK")
</pallas_src>

<mosaic_0001>
module attributes {stable_mosaic.version = 11 : i64} {
  func.func @encoder_kernel(%arg0: memref<2x16x80xf32, #tpu.memory_space<vmem>>, %arg1: memref<2x16xf32, #tpu.memory_space<vmem>>, %arg2: memref<80x128xbf16, #tpu.memory_space<vmem>>, %arg3: memref<1x128xf32, #tpu.memory_space<vmem>>, %arg4: memref<128x128xbf16, #tpu.memory_space<vmem>>, %arg5: memref<128x128xbf16, #tpu.memory_space<vmem>>, %arg6: memref<128x128xbf16, #tpu.memory_space<vmem>>, %arg7: memref<128x128xbf16, #tpu.memory_space<vmem>>, %arg8: memref<1x128xf32, #tpu.memory_space<vmem>>, %arg9: memref<1x128xf32, #tpu.memory_space<vmem>>, %arg10: memref<128x256xbf16, #tpu.memory_space<vmem>>, %arg11: memref<1x256xf32, #tpu.memory_space<vmem>>, %arg12: memref<256x128xbf16, #tpu.memory_space<vmem>>, %arg13: memref<1x128xf32, #tpu.memory_space<vmem>>, %arg14: memref<1x128xf32, #tpu.memory_space<vmem>>, %arg15: memref<1x128xf32, #tpu.memory_space<vmem>>, %arg16: memref<2x16x128xf32, #tpu.memory_space<vmem>>) attributes {dimension_semantics = [], scalar_prefetch = 0 : i64, scratch_operands = 0 : i64, tpu.core_type = #tpu.core_type<tc>} {
    %c0 = arith.constant 0 : index
    %c0_0 = arith.constant 0 : index
    %c0_1 = arith.constant 0 : index
    %0 = vector.load %arg0[%c0, %c0_0, %c0_1] : memref<2x16x80xf32, #tpu.memory_space<vmem>>, vector<2x16x80xf32>
    %1 = vector.shape_cast %0 : vector<2x16x80xf32> to vector<32x80xf32>
    %2 = arith.truncf %1 : vector<32x80xf32> to vector<32x80xbf16>
    %c0_2 = arith.constant 0 : index
    %c0_3 = arith.constant 0 : index
    %3 = vector.load %arg2[%c0_2, %c0_3] : memref<80x128xbf16, #tpu.memory_space<vmem>>, vector<80x128xbf16>
    %cst = arith.constant dense<0.000000e+00> : vector<32x128xf32>
    %4 = tpu.matmul %2, %3, %cst {dimension_numbers = #tpu.dot_dimension_numbers<[1], [0], [0], [1], [0, 0, 1, 1], [], []>} : vector<32x80xbf16>, vector<80x128xbf16>, vector<32x128xf32> -> vector<32x128xf32>
    %c0_4 = arith.constant 0 : index
    %c0_5 = arith.constant 0 : index
    %5 = vector.load %arg3[%c0_4, %c0_5] : memref<1x128xf32, #tpu.memory_space<vmem>>, vector<1x128xf32>
    %6 = vector.broadcast %5 : vector<1x128xf32> to vector<32x128xf32>
    %7 = arith.addf %4, %6 : vector<32x128xf32>
    %8 = arith.truncf %7 : vector<32x128xf32> to vector<32x128xbf16>
    %c0_6 = arith.constant 0 : index
    %c0_7 = arith.constant 0 : index
    %9 = vector.load %arg4[%c0_6, %c0_7] : memref<128x128xbf16, #tpu.memory_space<vmem>>, vector<128x128xbf16>
    %cst_8 = arith.constant dense<0.000000e+00> : vector<32x128xf32>
    %10 = tpu.matmul %8, %9, %cst_8 {dimension_numbers = #tpu.dot_dimension_numbers<[1], [0], [0], [1], [0, 0, 1, 1], [], []>} : vector<32x128xbf16>, vector<128x128xbf16>, vector<32x128xf32> -> vector<32x128xf32>
    %11 = vector.shape_cast %10 : vector<32x128xf32> to vector<2x16x128xf32>
    %c0_9 = arith.constant 0 : index
    %c0_10 = arith.constant 0 : index
    %12 = vector.load %arg5[%c0_9, %c0_10] : memref<128x128xbf16, #tpu.memory_space<vmem>>, vector<128x128xbf16>
    %cst_11 = arith.constant dense<0.000000e+00> : vector<32x128xf32>
    %13 = tpu.matmul %8, %12, %cst_11 {dimension_numbers = #tpu.dot_dimension_numbers<[1], [0], [0], [1], [0, 0, 1, 1], [], []>} : vector<32x128xbf16>, vector<128x128xbf16>, vector<32x128xf32> -> vector<32x128xf32>
    %14 = vector.shape_cast %13 : vector<32x128xf32> to vector<2x16x128xf32>
    %c0_12 = arith.constant 0 : index
    %c0_13 = arith.constant 0 : index
    %15 = vector.load %arg6[%c0_12, %c0_13] : memref<128x128xbf16, #tpu.memory_space<vmem>>, vector<128x128xbf16>
    %cst_14 = arith.constant dense<0.000000e+00> : vector<32x128xf32>
    %16 = tpu.matmul %8, %15, %cst_14 {dimension_numbers = #tpu.dot_dimension_numbers<[1], [0], [0], [1], [0, 0, 1, 1], [], []>} : vector<32x128xbf16>, vector<128x128xbf16>, vector<32x128xf32> -> vector<32x128xf32>
    %17 = vector.shape_cast %16 : vector<32x128xf32> to vector<2x16x128xf32>
    %18 = arith.truncf %11 : vector<2x16x128xf32> to vector<2x16x128xbf16>
    %19 = arith.truncf %14 : vector<2x16x128xf32> to vector<2x16x128xbf16>
    "tpu.trace_start"() <{level = 10 : i32, message = "bqd,bkd->bqk"}> : () -> ()
    %cst_15 = arith.constant dense<0.000000e+00> : vector<2x16x16xf32>
    %20 = tpu.matmul %18, %19, %cst_15 {dimension_numbers = #tpu.dot_dimension_numbers<[2], [2], [1], [1], [0, 0, 0, 1, 1, 1], [0], [0]>} : vector<2x16x128xbf16>, vector<2x16x128xbf16>, vector<2x16x16xf32> -> vector<2x16x16xf32>
    "tpu.trace_stop"() : () -> ()
    %cst_16 = arith.constant 0.0883883461 : f32
    %21 = vector.broadcast %cst_16 : f32 to vector<2x16x16xf32>
    %22 = arith.mulf %20, %21 : vector<2x16x16xf32>
    %c0_17 = arith.constant 0 : index
    %c0_18 = arith.constant 0 : index
    %23 = vector.load %arg1[%c0_17, %c0_18] : memref<2x16xf32, #tpu.memory_space<vmem>>, vector<2x16xf32>
    %24 = vector.shape_cast %23 : vector<2x16xf32> to vector<2x1x16xf32>
    %25 = vector.broadcast %24 : vector<2x1x16xf32> to vector<2x16x16xf32>
    %26 = arith.addf %22, %25 : vector<2x16x16xf32>
    %cst_19 = arith.constant dense<0xFF800000> : vector<2x16xf32>
    %27 = vector.multi_reduction <maximumf>, %26, %cst_19 [2] : vector<2x16x16xf32> to vector<2x16xf32>
    %28 = vector.shape_cast %27 : vector<2x16xf32> to vector<2x16x1xf32>
    %29 = vector.broadcast %28 : vector<2x16x1xf32> to vector<2x16x16xf32>
    %30 = arith.subf %26, %29 : vector<2x16x16xf32>
    %31 = math.exp %30 : vector<2x16x16xf32>
    %cst_20 = arith.constant dense<0.000000e+00> : vector<2x16xf32>
    %32 = vector.multi_reduction <add>, %31, %cst_20 [2] : vector<2x16x16xf32> to vector<2x16xf32>
    %33 = vector.shape_cast %32 : vector<2x16xf32> to vector<2x16x1xf32>
    %34 = tpu.reciprocal %33 {approx = true} : vector<2x16x1xf32> -> vector<2x16x1xf32>
    %35 = vector.broadcast %34 : vector<2x16x1xf32> to vector<2x16x16xf32>
    %36 = arith.mulf %31, %35 : vector<2x16x16xf32>
    %37 = arith.truncf %36 : vector<2x16x16xf32> to vector<2x16x16xbf16>
    %38 = arith.truncf %17 : vector<2x16x128xf32> to vector<2x16x128xbf16>
    "tpu.trace_start"() <{level = 10 : i32, message = "bqk,bkd->bqd"}> : () -> ()
    %cst_21 = arith.constant dense<0.000000e+00> : vector<2x16x128xf32>
    %39 = tpu.matmul %37, %38, %cst_21 {dimension_numbers = #tpu.dot_dimension_numbers<[2], [1], [1], [2], [0, 0, 0, 1, 1, 2], [0], [0]>} : vector<2x16x16xbf16>, vector<2x16x128xbf16>, vector<2x16x128xf32> -> vector<2x16x128xf32>
    "tpu.trace_stop"() : () -> ()
    %40 = vector.shape_cast %39 : vector<2x16x128xf32> to vector<32x128xf32>
    %41 = arith.truncf %40 : vector<32x128xf32> to vector<32x128xbf16>
    %c0_22 = arith.constant 0 : index
    %c0_23 = arith.constant 0 : index
    %42 = vector.load %arg7[%c0_22, %c0_23] : memref<128x128xbf16, #tpu.memory_space<vmem>>, vector<128x128xbf16>
    %cst_24 = arith.constant dense<0.000000e+00> : vector<32x128xf32>
    %43 = tpu.matmul %41, %42, %cst_24 {dimension_numbers = #tpu.dot_dimension_numbers<[1], [0], [0], [1], [0, 0, 1, 1], [], []>} : vector<32x128xbf16>, vector<128x128xbf16>, vector<32x128xf32> -> vector<32x128xf32>
    %44 = arith.addf %7, %43 : vector<32x128xf32>
    %c0_25 = arith.constant 0 : index
    %c0_26 = arith.constant 0 : index
    %45 = vector.load %arg8[%c0_25, %c0_26] : memref<1x128xf32, #tpu.memory_space<vmem>>, vector<1x128xf32>
    %c0_27 = arith.constant 0 : index
    %c0_28 = arith.constant 0 : index
    %46 = vector.load %arg9[%c0_27, %c0_28] : memref<1x128xf32, #tpu.memory_space<vmem>>, vector<1x128xf32>
    %cst_29 = arith.constant dense<0.000000e+00> : vector<32xf32>
    %47 = vector.multi_reduction <add>, %44, %cst_29 [1] : vector<32x128xf32> to vector<32xf32>
    %48 = vector.shape_cast %47 : vector<32xf32> to vector<32x1xf32>
    %cst_30 = arith.constant 1.280000e+02 : f32
    %49 = vector.broadcast %cst_30 : f32 to vector<32x1xf32>
    %50 = arith.divf %48, %49 : vector<32x1xf32>
    %51 = vector.broadcast %50 : vector<32x1xf32> to vector<32x128xf32>
    %52 = arith.subf %44, %51 : vector<32x128xf32>
    %53 = arith.mulf %52, %52 : vector<32x128xf32>
    %cst_31 = arith.constant dense<0.000000e+00> : vector<32xf32>
    %54 = vector.multi_reduction <add>, %53, %cst_31 [1] : vector<32x128xf32> to vector<32xf32>
    %55 = vector.shape_cast %54 : vector<32xf32> to vector<32x1xf32>
    %cst_32 = arith.constant 1.280000e+02 : f32
    %56 = vector.broadcast %cst_32 : f32 to vector<32x1xf32>
    %57 = arith.divf %55, %56 : vector<32x1xf32>
    %58 = vector.broadcast %50 : vector<32x1xf32> to vector<32x128xf32>
    %59 = arith.subf %44, %58 : vector<32x128xf32>
    %cst_33 = arith.constant 9.99999996E-13 : f32
    %60 = vector.broadcast %cst_33 : f32 to vector<32x1xf32>
    %61 = arith.addf %57, %60 : vector<32x1xf32>
    %62 = math.rsqrt %61 : vector<32x1xf32>
    %63 = vector.broadcast %62 : vector<32x1xf32> to vector<32x128xf32>
    %64 = arith.mulf %59, %63 : vector<32x128xf32>
    %65 = vector.broadcast %45 : vector<1x128xf32> to vector<32x128xf32>
    %66 = arith.mulf %64, %65 : vector<32x128xf32>
    %67 = vector.broadcast %46 : vector<1x128xf32> to vector<32x128xf32>
    %68 = arith.addf %66, %67 : vector<32x128xf32>
    %69 = arith.truncf %68 : vector<32x128xf32> to vector<32x128xbf16>
    %c0_34 = arith.constant 0 : index
    %c0_35 = arith.constant 0 : index
    %70 = vector.load %arg10[%c0_34, %c0_35] : memref<128x256xbf16, #tpu.memory_space<vmem>>, vector<128x256xbf16>
    %cst_36 = arith.constant dense<0.000000e+00> : vector<32x256xf32>
    %71 = tpu.matmul %69, %70, %cst_36 {dimension_numbers = #tpu.dot_dimension_numbers<[1], [0], [0], [1], [0, 0, 1, 1], [], []>} : vector<32x128xbf16>, vector<128x256xbf16>, vector<32x256xf32> -> vector<32x256xf32>
    %c0_37 = arith.constant 0 : index
    %c0_38 = arith.constant 0 : index
    %72 = vector.load %arg11[%c0_37, %c0_38] : memref<1x256xf32, #tpu.memory_space<vmem>>, vector<1x256xf32>
    %73 = vector.broadcast %72 : vector<1x256xf32> to vector<32x256xf32>
    %74 = arith.addf %71, %73 : vector<32x256xf32>
    %cst_39 = arith.constant 0.000000e+00 : f32
    %75 = vector.broadcast %cst_39 : f32 to vector<32x256xf32>
    %76 = arith.maximumf %74, %75 : vector<32x256xf32>
    %77 = arith.truncf %76 : vector<32x256xf32> to vector<32x256xbf16>
    %c0_40 = arith.constant 0 : index
    %c0_41 = arith.constant 0 : index
    %78 = vector.load %arg12[%c0_40, %c0_41] : memref<256x128xbf16, #tpu.memory_space<vmem>>, vector<256x128xbf16>
    %cst_42 = arith.constant dense<0.000000e+00> : vector<32x128xf32>
    %79 = tpu.matmul %77, %78, %cst_42 {dimension_numbers = #tpu.dot_dimension_numbers<[1], [0], [0], [1], [0, 0, 1, 1], [], []>} : vector<32x256xbf16>, vector<256x128xbf16>, vector<32x128xf32> -> vector<32x128xf32>
    %c0_43 = arith.constant 0 : index
    %c0_44 = arith.constant 0 : index
    %80 = vector.load %arg13[%c0_43, %c0_44] : memref<1x128xf32, #tpu.memory_space<vmem>>, vector<1x128xf32>
    %81 = vector.broadcast %80 : vector<1x128xf32> to vector<32x128xf32>
    %82 = arith.addf %79, %81 : vector<32x128xf32>
    %83 = arith.addf %68, %82 : vector<32x128xf32>
    %c0_45 = arith.constant 0 : index
    %c0_46 = arith.constant 0 : index
    %84 = vector.load %arg14[%c0_45, %c0_46] : memref<1x128xf32, #tpu.memory_space<vmem>>, vector<1x128xf32>
    %c0_47 = arith.constant 0 : index
    %c0_48 = arith.constant 0 : index
    %85 = vector.load %arg15[%c0_47, %c0_48] : memref<1x128xf32, #tpu.memory_space<vmem>>, vector<1x128xf32>
    %cst_49 = arith.constant dense<0.000000e+00> : vector<32xf32>
    %86 = vector.multi_reduction <add>, %83, %cst_49 [1] : vector<32x128xf32> to vector<32xf32>
    %87 = vector.shape_cast %86 : vector<32xf32> to vector<32x1xf32>
    %cst_50 = arith.constant 1.280000e+02 : f32
    %88 = vector.broadcast %cst_50 : f32 to vector<32x1xf32>
    %89 = arith.divf %87, %88 : vector<32x1xf32>
    %90 = vector.broadcast %89 : vector<32x1xf32> to vector<32x128xf32>
    %91 = arith.subf %83, %90 : vector<32x128xf32>
    %92 = arith.mulf %91, %91 : vector<32x128xf32>
    %cst_51 = arith.constant dense<0.000000e+00> : vector<32xf32>
    %93 = vector.multi_reduction <add>, %92, %cst_51 [1] : vector<32x128xf32> to vector<32xf32>
    %94 = vector.shape_cast %93 : vector<32xf32> to vector<32x1xf32>
    %cst_52 = arith.constant 1.280000e+02 : f32
    %95 = vector.broadcast %cst_52 : f32 to vector<32x1xf32>
    %96 = arith.divf %94, %95 : vector<32x1xf32>
    %97 = vector.broadcast %89 : vector<32x1xf32> to vector<32x128xf32>
    %98 = arith.subf %83, %97 : vector<32x128xf32>
    %cst_53 = arith.constant 9.99999996E-13 : f32
    %99 = vector.broadcast %cst_53 : f32 to vector<32x1xf32>
    %100 = arith.addf %96, %99 : vector<32x1xf32>
    %101 = math.rsqrt %100 : vector<32x1xf32>
    %102 = vector.broadcast %101 : vector<32x1xf32> to vector<32x128xf32>
    %103 = arith.mulf %98, %102 : vector<32x128xf32>
    %104 = vector.broadcast %84 : vector<1x128xf32> to vector<32x128xf32>
    %105 = arith.mulf %103, %104 : vector<32x128xf32>
    %106 = vector.broadcast %85 : vector<1x128xf32> to vector<32x128xf32>
    %107 = arith.addf %105, %106 : vector<32x128xf32>
    %108 = vector.shape_cast %107 : vector<32x128xf32> to vector<2x16x128xf32>
    %c0_54 = arith.constant 0 : index
    %c0_55 = arith.constant 0 : index
    %c0_56 = arith.constant 0 : index
    %109 = vector.load %arg16[%c0_54, %c0_55, %c0_56] : memref<2x16x128xf32, #tpu.memory_space<vmem>>, vector<2x16x128xf32>
    tpu.vector_store %arg16[%c0_54, %c0_55, %c0_56], %108 {strides = array<i32>} : memref<2x16x128xf32, #tpu.memory_space<vmem>>, vector<2x16x128xf32>,
    return
  }
}

</mosaic_0001>

<llo_original>
// kernel: tpu_custom_call.1
$region0: #{tpu_custom_call.1}
  #allocation0 [shape = 'u32[]', space=smem, size = 0x4, offset = 0x4, fixed_abs, tag = 'smem constant byte address 0x4 - core index']
  #allocation1 [shape = 'u32[144,128]{1,0:T(1,128)}', space=vmem, size = 0x12000, scoped, tag = 'internal scratch']
  %s0 = inlined_call_operand.hbm [shape: f32[2,16,80], index: 0, kind: input, shape index: {}]
  %s1 = inlined_call_operand.vmem [shape: f32[2,16], index: 1, kind: input, shape index: {}]
  %s2 = inlined_call_operand.hbm [shape: bf16[80,128], index: 2, kind: input, shape index: {}]
  %s3 = inlined_call_operand.vmem [shape: f32[1,128], index: 3, kind: input, shape index: {}]
  %s4 = inlined_call_operand.hbm [shape: bf16[128,128], index: 4, kind: input, shape index: {}]
  %s5 = inlined_call_operand.hbm [shape: bf16[128,128], index: 5, kind: input, shape index: {}]
  %s6 = inlined_call_operand.hbm [shape: bf16[128,128], index: 6, kind: input, shape index: {}]
  %s7 = inlined_call_operand.hbm [shape: bf16[128,128], index: 7, kind: input, shape index: {}]
  %s8 = inlined_call_operand.vmem [shape: f32[1,128], index: 8, kind: input, shape index: {}]
  %s9 = inlined_call_operand.vmem [shape: f32[1,128], index: 9, kind: input, shape index: {}]
  %s10 = inlined_call_operand.hbm [shape: bf16[128,256], index: 10, kind: input, shape index: {}]
  %s11 = inlined_call_operand.vmem [shape: f32[1,256], index: 11, kind: input, shape index: {}]
  %s12 = inlined_call_operand.hbm [shape: bf16[256,128], index: 12, kind: input, shape index: {}]
  %s13 = inlined_call_operand.vmem [shape: f32[1,128], index: 13, kind: input, shape index: {}]
  %s14 = inlined_call_operand.vmem [shape: f32[1,128], index: 14, kind: input, shape index: {}]
  %s15 = inlined_call_operand.vmem [shape: f32[1,128], index: 15, kind: input, shape index: {}]
  %s16 = inlined_call_operand.hbm [shape: f32[2,16,128], index: 16, kind: output, shape index: {}]
  %s17 = sld [smem:[#allocation0]]
  $region106: #{tpu_custom_call.1} parent=0
    _
  %s19 = ssub.s32 1, %s17
  %s20 = scalar_select 0, %s19, %s17
  $region1: #{tpu_custom_call.1} parent=0
    #allocation2 [shape = 'u8[16384]{0}', space=vmem, size = 0x4000, scoped, tag = 'input window, operand 0, single buffered']
    #allocation3 [shape = 's32[1]{0}', space=sflag, size = 0x4, scoped, tag = 'scoped memory for tpu_custom_call.1']
    #allocation4 [shape = 's32[1]{0}', space=sflag, size = 0x4, scoped, tag = 'scoped memory for tpu_custom_call.1']
    #allocation5 [shape = 'u8[20480]{0}', space=vmem, size = 0x5000, scoped, tag = 'input window, operand 2, single buffered']
    #allocation6 [shape = 's32[1]{0}', space=sflag, size = 0x4, scoped, tag = 'scoped memory for tpu_custom_call.1']
    #allocation7 [shape = 'u8[32768]{0}', space=vmem, size = 0x8000, scoped, tag = 'input window, operand 4, single buffered']
    #allocation8 [shape = 'u8[32768]{0}', space=vmem, size = 0x8000, scoped, tag = 'input window, operand 5, single buffered']
    #allocation9 [shape = 's32[1]{0}', space=sflag, size = 0x4, scoped, tag = 'scoped memory for tpu_custom_call.1']
    #allocation10 [shape = 'u8[32768]{0}', space=vmem, size = 0x8000, scoped, tag = 'input window, operand 6, single buffered']
    #allocation11 [shape = 'u8[32768]{0}', space=vmem, size = 0x8000, scoped, tag = 'input window, operand 7, single buffered']
    #allocation12 [shape = 's32[1]{0}', space=sflag, size = 0x4, scoped, tag = 'scoped memory for tpu_custom_call.1']
    #allocation13 [shape = 'u8[65536]{0}', space=vmem, size = 0x10000, scoped, tag = 'input window, operand 10, single buffered']
    #allocation14 [shape = 'u8[65536]{0}', space=vmem, size = 0x10000, scoped, tag = 'input window, operand 12, single buffered']
    #allocation15 [shape = 's32[1]{0}', space=sflag, size = 0x4, scoped, tag = 'scoped memory for tpu_custom_call.1']
    #allocation16 [shape = 'u8[16384]{0}', space=vmem, size = 0x4000, scoped, tag = 'output window, operand 0, single buffered']
    %21 = vsyncpa [#allocation3], 0
    %22 = vsyncpa [#allocation6], 0
    %23 = vsyncpa [#allocation9], 0
    %24 = vsyncpa [#allocation12], 0
    %25 = vsyncpa [#allocation15], 0
    %26 = vsyncpa [#allocation4], 0
    // Predicated region
    $region2: #{tpu_custom_call.1} parent=1 // pred_check
      _
    $region3: #{tpu_custom_call.1} parent=1 // pred_check_branch
      %28 = sbr.rel (0) target = $region5
    $region4: #{tpu_custom_call.1} parent=1 // pred_region
      %s30 = ssub.s32 512, 512
      %31 = vsyncadd [#allocation3], %s30
      %s32 = sshll.u32 [#allocation2], 4
      %s33 = int_to_ptr.vmem [resolvable:$true] %s32
      %38 = dma.hbm_to_vmem [thread:$0]  %s0, 512, %s33, [#allocation3], 128, 128, 8
    $region5: #{tpu_custom_call.1} parent=1 // pred_fallthru
      _
    // Predicated region
    $region6: #{tpu_custom_call.1} parent=1 // pred_check
      _
    $region7: #{tpu_custom_call.1} parent=1 // pred_check_branch
      %40 = sbr.rel (0) target = $region9
    $region8: #{tpu_custom_call.1} parent=1 // pred_region
      _
    $region9: #{tpu_custom_call.1} parent=1 // pred_fallthru
      _
    // Predicated region
    $region10: #{tpu_custom_call.1} parent=1 // pred_check
      _
    $region11: #{tpu_custom_call.1} parent=1 // pred_check_branch
      %42 = sbr.rel (0) target = $region13
    $region12: #{tpu_custom_call.1} parent=1 // pred_region
      %s44 = ssub.s32 640, 640
      %45 = vsyncadd [#allocation6], %s44
      %s46 = sshll.u32 [#allocation5], 4
      %s47 = int_to_ptr.vmem [resolvable:$true] %s46
      %52 = dma.hbm_to_vmem [thread:$0]  %s2, 640, %s47, [#allocation6], 64, 64, 4
    $region13: #{tpu_custom_call.1} parent=1 // pred_fallthru
      _
    // Predicated region
    $region14: #{tpu_custom_call.1} parent=1 // pred_check
      _
    $region15: #{tpu_custom_call.1} parent=1 // pred_check_branch
      %54 = sbr.rel (0) target = $region17
    $region16: #{tpu_custom_call.1} parent=1 // pred_region
      _
    $region17: #{tpu_custom_call.1} parent=1 // pred_fallthru
      _
    // Predicated region
    $region18: #{tpu_custom_call.1} parent=1 // pred_check
      _
    $region19: #{tpu_custom_call.1} parent=1 // pred_check_branch
      %56 = sbr.rel (0) target = $region21
    $region20: #{tpu_custom_call.1} parent=1 // pred_region
      %s58 = ssub.s32 1024, 1024
      %59 = vsyncadd [#allocation6], %s58
      %s60 = sshll.u32 [#allocation7], 4
      %s61 = int_to_ptr.vmem [resolvable:$true] %s60
      %66 = dma.hbm_to_vmem [thread:$0]  %s4, 1024, %s61, [#allocation6], 64, 64, 4
    $region21: #{tpu_custom_call.1} parent=1 // pred_fallthru
      _
    // Predicated region
    $region22: #{tpu_custom_call.1} parent=1 // pred_check
      _
    $region23: #{tpu_custom_call.1} parent=1 // pred_check_branch
      %68 = sbr.rel (0) target = $region25
    $region24: #{tpu_custom_call.1} parent=1 // pred_region
      %s70 = ssub.s32 1024, 1024
      %71 = vsyncadd [#allocation9], %s70
      %s72 = sshll.u32 [#allocation8], 4
      %s73 = int_to_ptr.vmem [resolvable:$true] %s72
      %78 = dma.hbm_to_vmem [thread:$0]  %s5, 1024, %s73, [#allocation9], 64, 64, 4
    $region25: #{tpu_custom_call.1} parent=1 // pred_fallthru
      _
    // Predicated region
    $region26: #{tpu_custom_call.1} parent=1 // pred_check
      _
    $region27: #{tpu_custom_call.1} parent=1 // pred_check_branch
      %80 = sbr.rel (0) target = $region29
    $region28: #{tpu_custom_call.1} parent=1 // pred_region
      %s82 = ssub.s32 1024, 1024
      %83 = vsyncadd [#allocation9], %s82
      %s84 = sshll.u32 [#allocation10], 4
      %s85 = int_to_ptr.vmem [resolvable:$true] %s84
      %90 = dma.hbm_to_vmem [thread:$0]  %s6, 1024, %s85, [#allocation9], 64, 64, 4
    $region29: #{tpu_custom_call.1} parent=1 // pred_fallthru
      _
    // Predicated region
    $region30: #{tpu_custom_call.1} parent=1 // pred_check
      _
    $region31: #{tpu_custom_call.1} parent=1 // pred_check_branch
      %92 = sbr.rel (0) target = $region33
    $region32: #{tpu_custom_call.1} parent=1 // pred_region
      %s94 = ssub.s32 1024, 1024
      %95 = vsyncadd [#allocation12], %s94
      %s96 = sshll.u32 [#allocation11], 4
      %s97 = int_to_ptr.vmem [resolvable:$true] %s96
      %102 = dma.hbm_to_vmem [thread:$0]  %s7, 1024, %s97, [#allocation12], 64, 64, 4
    $region33: #{tpu_custom_call.1} parent=1 // pred_fallthru
      _
    // Predicated region
    $region34: #{tpu_custom_call.1} parent=1 // pred_check
      _
    $region35: #{tpu_custom_call.1} parent=1 // pred_check_branch
      %104 = sbr.rel (0) target = $region37
    $region36: #{tpu_custom_call.1} parent=1 // pred_region
      _
    $region37: #{tpu_custom_call.1} parent=1 // pred_fallthru
      _
    // Predicated region
    $region38: #{tpu_custom_call.1} parent=1 // pred_check
      _
    $region39: #{tpu_custom_call.1} parent=1 // pred_check_branch
      %106 = sbr.rel (0) target = $region41
    $region40: #{tpu_custom_call.1} parent=1 // pred_region
      _
    $region41: #{tpu_custom_call.1} parent=1 // pred_fallthru
      _
    // Predicated region
    $region42: #{tpu_custom_call.1} parent=1 // pred_check
      _
    $region43: #{tpu_custom_call.1} parent=1 // pred_check_branch
      %108 = sbr.rel (0) target = $region45
    $region44: #{tpu_custom_call.1} parent=1 // pred_region
      %s110 = ssub.s32 2048, 2048
      %111 = vsyncadd [#allocation12], %s110
      %s112 = sshll.u32 [#allocation13], 4
      %s113 = int_to_ptr.vmem [resolvable:$true] %s112
      %118 = dma.hbm_to_vmem [thread:$0]  %s10, 2048, %s113, [#allocation12], 128, 128, 8
    $region45: #{tpu_custom_call.1} parent=1 // pred_fallthru
      _
    // Predicated region
    $region46: #{tpu_custom_call.1} parent=1 // pred_check
      _
    $region47: #{tpu_custom_call.1} parent=1 // pred_check_branch
      %120 = sbr.rel (0) target = $region49
    $region48: #{tpu_custom_call.1} parent=1 // pred_region
      _
    $region49: #{tpu_custom_call.1} parent=1 // pred_fallthru
      _
    // Predicated region
    $region50: #{tpu_custom_call.1} parent=1 // pred_check
      _
    $region51: #{tpu_custom_call.1} parent=1 // pred_check_branch
      %122 = sbr.rel (0) target = $region53
    $region52: #{tpu_custom_call.1} parent=1 // pred_region
      %s124 = ssub.s32 2048, 2048
      %125 = vsyncadd [#allocation15], %s124
      %s126 = sshll.u32 [#allocation14], 4
      %s127 = int_to_ptr.vmem [resolvable:$true] %s126
      %132 = dma.hbm_to_vmem [thread:$0]  %s12, 2048, %s127, [#allocation15], 64, 64, 4
    $region53: #{tpu_custom_call.1} parent=1 // pred_fallthru
      _
    // Predicated region
    $region54: #{tpu_custom_call.1} parent=1 // pred_check
      _
    $region55: #{tpu_custom_call.1} parent=1 // pred_check_branch
      %134 = sbr.rel (0) target = $region57
    $region56: #{tpu_custom_call.1} parent=1 // pred_region
      _
    $region57: #{tpu_custom_call.1} parent=1 // pred_fallthru
      _
    // Predicated region
    $region58: #{tpu_custom_call.1} parent=1 // pred_check
      _
    $region59: #{tpu_custom_call.1} parent=1 // pred_check_branch
      %136 = sbr.rel (0) target = $region61
    $region60: #{tpu_custom_call.1} parent=1 // pred_region
      _
    $region61: #{tpu_custom_call.1} parent=1 // pred_fallthru
      _
    // Predicated region
    $region62: #{tpu_custom_call.1} parent=1 // pred_check
      _
    $region63: #{tpu_custom_call.1} parent=1 // pred_check_branch
      %138 = sbr.rel (0) target = $region65
    $region64: #{tpu_custom_call.1} parent=1 // pred_region
      _
    $region65: #{tpu_custom_call.1} parent=1 // pred_fallthru
      _
    // Predicated region
    $region66: #{tpu_custom_call.1} parent=1 // pred_check
      _
    $region67: #{tpu_custom_call.1} parent=1 // pred_check_branch
      %140 = sbr.rel (0) target = $region69
    $region68: #{tpu_custom_call.1} parent=1 // pred_region
      %141 = dma.done [#allocation3], 512
    $region69: #{tpu_custom_call.1} parent=1 // pred_fallthru
      _
    // Predicated region
    $region70: #{tpu_custom_call.1} parent=1 // pred_check
      _
    $region71: #{tpu_custom_call.1} parent=1 // pred_check_branch
      %143 = sbr.rel (0) target = $region73
    $region72: #{tpu_custom_call.1} parent=1 // pred_region
      %144 = dma.done [#allocation6], 640
    $region73: #{tpu_custom_call.1} parent=1 // pred_fallthru
      _
    // Predicated region
    $region74: #{tpu_custom_call.1} parent=1 // pred_check
      _
    $region75: #{tpu_custom_call.1} parent=1 // pred_check_branch
      %146 = sbr.rel (0) target = $region77
    $region76: #{tpu_custom_call.1} parent=1 // pred_region
      %147 = dma.done [#allocation6], 1024
    $region77: #{tpu_custom_call.1} parent=1 // pred_fallthru
      _
    // Predicated region
    $region78: #{tpu_custom_call.1} parent=1 // pred_check
      _
    $region79: #{tpu_custom_call.1} parent=1 // pred_check_branch
      %149 = sbr.rel (0) target = $region81
    $region80: #{tpu_custom_call.1} parent=1 // pred_region
      %150 = dma.done [#allocation9], 1024
    $region81: #{tpu_custom_call.1} parent=1 // pred_fallthru
      _
    // Predicated region
    $region82: #{tpu_custom_call.1} parent=1 // pred_check
      _
    $region83: #{tpu_custom_call.1} parent=1 // pred_check_branch
      %152 = sbr.rel (0) target = $region85
    $region84: #{tpu_custom_call.1} parent=1 // pred_region
      %153 = dma.done [#allocation9], 1024
    $region85: #{tpu_custom_call.1} parent=1 // pred_fallthru
      _
    // Predicated region
    $region86: #{tpu_custom_call.1} parent=1 // pred_check
      _
    $region87: #{tpu_custom_call.1} parent=1 // pred_check_branch
      %155 = sbr.rel (0) target = $region89
    $region88: #{tpu_custom_call.1} parent=1 // pred_region
      %156 = dma.done [#allocation12], 1024
    $region89: #{tpu_custom_call.1} parent=1 // pred_fallthru
      _
    // Predicated region
    $region90: #{tpu_custom_call.1} parent=1 // pred_check
      _
    $region91: #{tpu_custom_call.1} parent=1 // pred_check_branch
      %158 = sbr.rel (0) target = $region93
    $region92: #{tpu_custom_call.1} parent=1 // pred_region
      %159 = dma.done [#allocation12], 2048
    $region93: #{tpu_custom_call.1} parent=1 // pred_fallthru
      _
    // Predicated region
    $region94: #{tpu_custom_call.1} parent=1 // pred_check
      _
    $region95: #{tpu_custom_call.1} parent=1 // pred_check_branch
      %161 = sbr.rel (0) target = $region97
    $region96: #{tpu_custom_call.1} parent=1 // pred_region
      %162 = dma.done [#allocation15], 2048
    $region97: #{tpu_custom_call.1} parent=1 // pred_fallthru
      _
    %v164 = vld [vmem:[#allocation2] sm:$0xff]
    %v165 = vld [vmem:[#allocation2 + $0x8] sm:$0xff]
    %v166 = vld [vmem:[#allocation2 + $0x10] sm:$0xff]
    %v167 = vld [vmem:[#allocation2 + $0x18] sm:$0xff]
    %v168 = vpack.c.bf16 %v165, %v164
    %v169 = vpack.c.bf16 %v167, %v166
    %v170 = vld [vmem:[#allocation5] sm:$0xf]
    %v171 = vld [vmem:[#allocation5 + $0x4] sm:$0xf]
    %v172 = vld [vmem:[#allocation5 + $0x8] sm:$0xf]
    %v173 = vld [vmem:[#allocation5 + $0xc] sm:$0xf]
    %v174 = vld [vmem:[#allocation5 + $0x10] sm:$0xf]
    %v175 = vld [vmem:[#allocation5 + $0x14] sm:$0xf]
    %v176 = vld [vmem:[#allocation5 + $0x18] sm:$0xf]
    %v177 = vld [vmem:[#allocation5 + $0x1c] sm:$0xf]
    %v178 = vld [vmem:[#allocation5 + $0x20] sm:$0xf]
    %v179 = vld [vmem:[#allocation5 + $0x24] sm:$0xf]
    %v180 = vld [vmem:[%s3] sm:$0x1]
    %v182 = vlaneseq
    %v183 = vshrl.u32 %v182, 7
    %v184 = vsub.s32 0, %v183
    %v185 = vrot.slane %v180, %v184
    %v197 = vunpack.c.l.b16 %v170
    %v198 = vunpack.c.l.b16 %v171
    %v199 = vunpack.c.l.b16 %v172
    %v200 = vunpack.c.l.b16 %v173
    %v201 = vunpack.c.l.b16 %v174
    %v202 = vunpack.c.l.b16 %v175
    %v203 = vunpack.c.l.b16 %v176
    %v204 = vunpack.c.l.b16 %v177
    %v205 = vunpack.c.l.b16 %v178
    %v206 = vunpack.c.l.b16 %v179
    %v207 = vpack.c.b16 %v198, %v197
    %v208 = vpack.c.b16 %v200, %v199
    %v209 = vpack.c.b16 %v202, %v201
    %v210 = vpack.c.b16 %v204, %v203
    %v211 = vpack.c.b16 %v206, %v205
    %vm217 = vcmask 654336
    %v219 = vsel %vm217, %v168, 0
    %v222 = vsel %vm217, %v169, 0
    %224 = vmatprep.subr.bf16.mxu0 0
    %225 = vmatpush1.bf16.msra.mxu0 %v207
    %226 = vmatprep.subr.bf16.mxu0 0
    %227 = vmatpush1.bf16.msra.mxu0 %v208
    %228 = vmatprep.subr.bf16.mxu0 0
    %229 = vmatpush1.bf16.msra.mxu0 %v209
    %230 = vmatprep.subr.bf16.mxu0 0
    %231 = vmatpush1.bf16.msra.mxu0 %v210
    %232 = vmatprep.subr.bf16.mxu0 0
    %233 = vmatpush1.bf16.msra.mxu0 %v211
    %234 = vmatprep.subr.bf16.mxu0 0
    %235 = vmatpush1.bf16.msra.mxu0 0
    %236 = vmatprep.subr.bf16.mxu0 0
    %237 = vmatpush1.bf16.msra.mxu0 0
    %238 = vmatprep.subr.bf16.mxu0 0
    %239 = vmatpush1.bf16.msra.mxu0 0
    %240 = vmatprep.subr.bf16.mxu0 0
    %241 = vmatpush1.bf16.msra.mxu0 0
    %242 = vmatprep.subr.bf16.mxu0 0
    %243 = vmatpush1.bf16.msra.mxu0 0
    %244 = vmatprep.subr.bf16.mxu0 0
    %245 = vmatpush1.bf16.msra.mxu0 0
    %246 = vmatprep.subr.bf16.mxu0 0
    %247 = vmatpush1.bf16.msra.mxu0 0
    %248 = vmatprep.subr.bf16.mxu0 0
    %249 = vmatpush1.bf16.msra.mxu0 0
    %250 = vmatprep.subr.bf16.mxu0 0
    %251 = vmatpush1.bf16.msra.mxu0 0
    %252 = vmatprep.subr.bf16.mxu0 0
    %253 = vmatpush1.bf16.msra.mxu0 0
    %254 = vmatprep.subr.bf16.mxu0 0
    %255 = vmatpush1.bf16.msra.mxu0 0
    %256 = vmatprep.mubr.bf16.mxu0 0
    %257 = vmatmul.mubr.bf16.gmra.mrb[0].mxu0 %v219
    %v258 = vpop.f32.mrb[0].mxu0
    %v259 = vadd.f32 %v185, %v258
    %v260 = vpop.f32.mrb[0].mxu0
    %v261 = vpop.f32.mrb[0].mxu0
    %v262 = vadd.f32 %v185, %v261
    %v263 = vpop.f32.mrb[0].mxu0
    %264 = vmatprep.mubr.bf16.mxu0 0
    %265 = vmatmul.mubr.bf16.gmra.mrb[0].mxu0 %v222
    %v266 = vpop.f32.mrb[0].mxu0
    %v267 = vadd.f32 %v185, %v266
    %v268 = vpop.f32.mrb[0].mxu0
    %v269 = vpop.f32.mrb[0].mxu0
    %v270 = vadd.f32 %v185, %v269
    %v271 = vpop.f32.mrb[0].mxu0
    %272 = vdwg.mxu0
    %v273 = vpack.c.bf16 %v262, %v259
    %v274 = vpack.c.bf16 %v270, %v267
    %v275 = vld [vmem:[#allocation7] sm:$0xf]
    %v276 = vld [vmem:[#allocation7 + $0x4] sm:$0xf]
    %v277 = vld [vmem:[#allocation7 + $0x8] sm:$0xf]
    %v278 = vld [vmem:[#allocation7 + $0xc] sm:$0xf]
    %v279 = vld [vmem:[#allocation7 + $0x10] sm:$0xf]
    %v280 = vld [vmem:[#allocation7 + $0x14] sm:$0xf]
    %v281 = vld [vmem:[#allocation7 + $0x18] sm:$0xf]
    %v282 = vld [vmem:[#allocation7 + $0x1c] sm:$0xf]
    %v283 = vld [vmem:[#allocation7 + $0x20] sm:$0xf]
    %v284 = vld [vmem:[#allocation7 + $0x24] sm:$0xf]
    %v285 = vld [vmem:[#allocation7 + $0x28] sm:$0xf]
    %v286 = vld [vmem:[#allocation7 + $0x2c] sm:$0xf]
    %v287 = vld [vmem:[#allocation7 + $0x30] sm:$0xf]
    %v288 = vld [vmem:[#allocation7 + $0x34] sm:$0xf]
    %v289 = vld [vmem:[#allocation7 + $0x38] sm:$0xf]
    %v290 = vld [vmem:[#allocation7 + $0x3c] sm:$0xf]
    %v307 = vunpack.c.l.b16 %v275
    %v308 = vunpack.c.l.b16 %v276
    %v309 = vunpack.c.l.b16 %v277
    %v310 = vunpack.c.l.b16 %v278
    %v311 = vunpack.c.l.b16 %v279
    %v312 = vunpack.c.l.b16 %v280
    %v313 = vunpack.c.l.b16 %v281
    %v314 = vunpack.c.l.b16 %v282
    %v315 = vunpack.c.l.b16 %v283
    %v316 = vunpack.c.l.b16 %v284
    %v317 = vunpack.c.l.b16 %v285
    %v318 = vunpack.c.l.b16 %v286
    %v319 = vunpack.c.l.b16 %v287
    %v320 = vunpack.c.l.b16 %v288
    %v321 = vunpack.c.l.b16 %v289
    %v322 = vunpack.c.l.b16 %v290
    %v323 = vpack.c.b16 %v308, %v307
    %v324 = vpack.c.b16 %v310, %v309
    %v325 = vpack.c.b16 %v312, %v311
    %v326 = vpack.c.b16 %v314, %v313
    %v327 = vpack.c.b16 %v316, %v315
    %v328 = vpack.c.b16 %v318, %v317
    %v329 = vpack.c.b16 %v320, %v319
    %v330 = vpack.c.b16 %v322, %v321
    %339 = vmatprep.subr.bf16.mxu0 0
    %340 = vmatpush1.bf16.msra.mxu0 %v323
    %341 = vmatprep.subr.bf16.mxu0 0
    %342 = vmatpush1.bf16.msra.mxu0 %v324
    %343 = vmatprep.subr.bf16.mxu0 0
    %344 = vmatpush1.bf16.msra.mxu0 %v325
    %345 = vmatprep.subr.bf16.mxu0 0
    %346 = vmatpush1.bf16.msra.mxu0 %v326
    %347 = vmatprep.subr.bf16.mxu0 0
    %348 = vmatpush1.bf16.msra.mxu0 %v327
    %349 = vmatprep.subr.bf16.mxu0 0
    %350 = vmatpush1.bf16.msra.mxu0 %v328
    %351 = vmatprep.subr.bf16.mxu0 0
    %352 = vmatpush1.bf16.msra.mxu0 %v329
    %353 = vmatprep.subr.bf16.mxu0 0
    %354 = vmatpush1.bf16.msra.mxu0 %v330
    %355 = vmatprep.subr.bf16.mxu0 0
    %356 = vmatpush1.bf16.msra.mxu0 0
    %357 = vmatprep.subr.bf16.mxu0 0
    %358 = vmatpush1.bf16.msra.mxu0 0
    %359 = vmatprep.subr.bf16.mxu0 0
    %360 = vmatpush1.bf16.msra.mxu0 0
    %361 = vmatprep.subr.bf16.mxu0 0
    %362 = vmatpush1.bf16.msra.mxu0 0
    %363 = vmatprep.subr.bf16.mxu0 0
    %364 = vmatpush1.bf16.msra.mxu0 0
    %365 = vmatprep.subr.bf16.mxu0 0
    %366 = vmatpush1.bf16.msra.mxu0 0
    %367 = vmatprep.subr.bf16.mxu0 0
    %368 = vmatpush1.bf16.msra.mxu0 0
    %369 = vmatprep.subr.bf16.mxu0 0
    %370 = vmatpush1.bf16.msra.mxu0 0
    %371 = vmatprep.mubr.bf16.mxu0 0
    %372 = vmatmul.mubr.bf16.gmra.mrb[0].mxu0 %v273
    %v373 = vpop.f32.mrb[0].mxu0
    %v374 = vadd.f32 0.0, %v373
    %v375 = vpop.f32.mrb[0].mxu0
    %v376 = vpop.f32.mrb[0].mxu0
    %v377 = vadd.f32 0.0, %v376
    %v378 = vpop.f32.mrb[0].mxu0
    %379 = vmatprep.mubr.bf16.mxu0 0
    %380 = vmatmul.mubr.bf16.gmra.mrb[0].mxu0 %v274
    %v381 = vpop.f32.mrb[0].mxu0
    %v382 = vadd.f32 0.0, %v381
    %v383 = vpop.f32.mrb[0].mxu0
    %v384 = vpop.f32.mrb[0].mxu0
    %v385 = vadd.f32 0.0, %v384
    %v386 = vpop.f32.mrb[0].mxu0
    %387 = vdwg.mxu0
    %v388 = vld [vmem:[#allocation8] sm:$0xf]
    %v389 = vld [vmem:[#allocation8 + $0x4] sm:$0xf]
    %v390 = vld [vmem:[#allocation8 + $0x8] sm:$0xf]
    %v391 = vld [vmem:[#allocation8 + $0xc] sm:$0xf]
    %v392 = vld [vmem:[#allocation8 + $0x10] sm:$0xf]
    %v393 = vld [vmem:[#allocation8 + $0x14] sm:$0xf]
    %v394 = vld [vmem:[#allocation8 + $0x18] sm:$0xf]
    %v395 = vld [vmem:[#allocation8 + $0x1c] sm:$0xf]
    %v396 = vld [vmem:[#allocation8 + $0x20] sm:$0xf]
    %v397 = vld [vmem:[#allocation8 + $0x24] sm:$0xf]
    %v398 = vld [vmem:[#allocation8 + $0x28] sm:$0xf]
    %v399 = vld [vmem:[#allocation8 + $0x2c] sm:$0xf]
    %v400 = vld [vmem:[#allocation8 + $0x30] sm:$0xf]
    %v401 = vld [vmem:[#allocation8 + $0x34] sm:$0xf]
    %v402 = vld [vmem:[#allocation8 + $0x38] sm:$0xf]
    %v403 = vld [vmem:[#allocation8 + $0x3c] sm:$0xf]
    %v420 = vunpack.c.l.b16 %v388
    %v421 = vunpack.c.l.b16 %v389
    %v422 = vunpack.c.l.b16 %v390
    %v423 = vunpack.c.l.b16 %v391
    %v424 = vunpack.c.l.b16 %v392
    %v425 = vunpack.c.l.b16 %v393
    %v426 = vunpack.c.l.b16 %v394
    %v427 = vunpack.c.l.b16 %v395
    %v428 = vunpack.c.l.b16 %v396
    %v429 = vunpack.c.l.b16 %v397
    %v430 = vunpack.c.l.b16 %v398
    %v431 = vunpack.c.l.b16 %v399
    %v432 = vunpack.c.l.b16 %v400
    %v433 = vunpack.c.l.b16 %v401
    %v434 = vunpack.c.l.b16 %v402
    %v435 = vunpack.c.l.b16 %v403
    %v436 = vpack.c.b16 %v421, %v420
    %v437 = vpack.c.b16 %v423, %v422
    %v438 = vpack.c.b16 %v425, %v424
    %v439 = vpack.c.b16 %v427, %v426
    %v440 = vpack.c.b16 %v429, %v428
    %v441 = vpack.c.b16 %v431, %v430
    %v442 = vpack.c.b16 %v433, %v432
    %v443 = vpack.c.b16 %v435, %v434
    %452 = vmatprep.subr.bf16.mxu0 0
    %453 = vmatpush1.bf16.msra.mxu0 %v436
    %454 = vmatprep.subr.bf16.mxu0 0
    %455 = vmatpush1.bf16.msra.mxu0 %v437
    %456 = vmatprep.subr.bf16.mxu0 0
    %457 = vmatpush1.bf16.msra.mxu0 %v438
    %458 = vmatprep.subr.bf16.mxu0 0
    %459 = vmatpush1.bf16.msra.mxu0 %v439
    %460 = vmatprep.subr.bf16.mxu0 0
    %461 = vmatpush1.bf16.msra.mxu0 %v440
    %462 = vmatprep.subr.bf16.mxu0 0
    %463 = vmatpush1.bf16.msra.mxu0 %v441
    %464 = vmatprep.subr.bf16.mxu0 0
    %465 = vmatpush1.bf16.msra.mxu0 %v442
    %466 = vmatprep.subr.bf16.mxu0 0
    %467 = vmatpush1.bf16.msra.mxu0 %v443
    %468 = vmatprep.subr.bf16.mxu0 0
    %469 = vmatpush1.bf16.msra.mxu0 0
    %470 = vmatprep.subr.bf16.mxu0 0
    %471 = vmatpush1.bf16.msra.mxu0 0
    %472 = vmatprep.subr.bf16.mxu0 0
    %473 = vmatpush1.bf16.msra.mxu0 0
    %474 = vmatprep.subr.bf16.mxu0 0
    %475 = vmatpush1.bf16.msra.mxu0 0
    %476 = vmatprep.subr.bf16.mxu0 0
    %477 = vmatpush1.bf16.msra.mxu0 0
    %478 = vmatprep.subr.bf16.mxu0 0
    %479 = vmatpush1.bf16.msra.mxu0 0
    %480 = vmatprep.subr.bf16.mxu0 0
    %481 = vmatpush1.bf16.msra.mxu0 0
    %482 = vmatprep.subr.bf16.mxu0 0
    %483 = vmatpush1.bf16.msra.mxu0 0
    %484 = vmatprep.mubr.bf16.mxu0 0
    %485 = vmatmul.mubr.bf16.gmra.mrb[0].mxu0 %v273
    %v486 = vpop.f32.mrb[0].mxu0
    %v487 = vadd.f32 0.0, %v486
    %v488 = vpop.f32.mrb[0].mxu0
    %v489 = vpop.f32.mrb[0].mxu0
    %v490 = vadd.f32 0.0, %v489
    %v491 = vpop.f32.mrb[0].mxu0
    %492 = vmatprep.mubr.bf16.mxu0 0
    %493 = vmatmul.mubr.bf16.gmra.mrb[0].mxu0 %v274
    %v494 = vpop.f32.mrb[0].mxu0
    %v495 = vadd.f32 0.0, %v494
    %v496 = vpop.f32.mrb[0].mxu0
    %v497 = vpop.f32.mrb[0].mxu0
    %v498 = vadd.f32 0.0, %v497
    %v499 = vpop.f32.mrb[0].mxu0
    %500 = vdwg.mxu0
    %v501 = vld [vmem:[#allocation10] sm:$0xf]
    %v502 = vld [vmem:[#allocation10 + $0x4] sm:$0xf]
    %v503 = vld [vmem:[#allocation10 + $0x8] sm:$0xf]
    %v504 = vld [vmem:[#allocation10 + $0xc] sm:$0xf]
    %v505 = vld [vmem:[#allocation10 + $0x10] sm:$0xf]
    %v506 = vld [vmem:[#allocation10 + $0x14] sm:$0xf]
    %v507 = vld [vmem:[#allocation10 + $0x18] sm:$0xf]
    %v508 = vld [vmem:[#allocation10 + $0x1c] sm:$0xf]
    %v509 = vld [vmem:[#allocation10 + $0x20] sm:$0xf]
    %v510 = vld [vmem:[#allocation10 + $0x24] sm:$0xf]
    %v511 = vld [vmem:[#allocation10 + $0x28] sm:$0xf]
    %v512 = vld [vmem:[#allocation10 + $0x2c] sm:$0xf]
    %v513 = vld [vmem:[#allocation10 + $0x30] sm:$0xf]
    %v514 = vld [vmem:[#allocation10 + $0x34] sm:$0xf]
    %v515 = vld [vmem:[#allocation10 + $0x38] sm:$0xf]
    %v516 = vld [vmem:[#allocation10 + $0x3c] sm:$0xf]
    %v533 = vunpack.c.l.b16 %v501
    %v534 = vunpack.c.l.b16 %v502
    %v535 = vunpack.c.l.b16 %v503
    %v536 = vunpack.c.l.b16 %v504
    %v537 = vunpack.c.l.b16 %v505
    %v538 = vunpack.c.l.b16 %v506
    %v539 = vunpack.c.l.b16 %v507
    %v540 = vunpack.c.l.b16 %v508
    %v541 = vunpack.c.l.b16 %v509
    %v542 = vunpack.c.l.b16 %v510
    %v543 = vunpack.c.l.b16 %v511
    %v544 = vunpack.c.l.b16 %v512
    %v545 = vunpack.c.l.b16 %v513
    %v546 = vunpack.c.l.b16 %v514
    %v547 = vunpack.c.l.b16 %v515
    %v548 = vunpack.c.l.b16 %v516
    %v549 = vpack.c.b16 %v534, %v533
    %v550 = vpack.c.b16 %v536, %v535
    %v551 = vpack.c.b16 %v538, %v537
    %v552 = vpack.c.b16 %v540, %v539
    %v553 = vpack.c.b16 %v542, %v541
    %v554 = vpack.c.b16 %v544, %v543
    %v555 = vpack.c.b16 %v546, %v545
    %v556 = vpack.c.b16 %v548, %v547
    %565 = vmatprep.subr.bf16.mxu0 0
    %566 = vmatpush1.bf16.msra.mxu0 %v549
    %567 = vmatprep.subr.bf16.mxu0 0
    %568 = vmatpush1.bf16.msra.mxu0 %v550
    %569 = vmatprep.subr.bf16.mxu0 0
    %570 = vmatpush1.bf16.msra.mxu0 %v551
    %571 = vmatprep.subr.bf16.mxu0 0
    %572 = vmatpush1.bf16.msra.mxu0 %v552
    %573 = vmatprep.subr.bf16.mxu0 0
    %574 = vmatpush1.bf16.msra.mxu0 %v553
    %575 = vmatprep.subr.bf16.mxu0 0
    %576 = vmatpush1.bf16.msra.mxu0 %v554
    %577 = vmatprep.subr.bf16.mxu0 0
    %578 = vmatpush1.bf16.msra.mxu0 %v555
    %579 = vmatprep.subr.bf16.mxu0 0
    %580 = vmatpush1.bf16.msra.mxu0 %v556
    %581 = vmatprep.subr.bf16.mxu0 0
    %582 = vmatpush1.bf16.msra.mxu0 0
    %583 = vmatprep.subr.bf16.mxu0 0
    %584 = vmatpush1.bf16.msra.mxu0 0
    %585 = vmatprep.subr.bf16.mxu0 0
    %586 = vmatpush1.bf16.msra.mxu0 0
    %587 = vmatprep.subr.bf16.mxu0 0
    %588 = vmatpush1.bf16.msra.mxu0 0
    %589 = vmatprep.subr.bf16.mxu0 0
    %590 = vmatpush1.bf16.msra.mxu0 0
    %591 = vmatprep.subr.bf16.mxu0 0
    %592 = vmatpush1.bf16.msra.mxu0 0
    %593 = vmatprep.subr.bf16.mxu0 0
    %594 = vmatpush1.bf16.msra.mxu0 0
    %595 = vmatprep.subr.bf16.mxu0 0
    %596 = vmatpush1.bf16.msra.mxu0 0
    %597 = vmatprep.mubr.bf16.mxu0 0
    %598 = vmatmul.mubr.bf16.gmra.mrb[0].mxu0 %v273
    %v599 = vpop.f32.mrb[0].mxu0
    %v600 = vadd.f32 0.0, %v599
    %v601 = vpop.f32.mrb[0].mxu0
    %v602 = vpop.f32.mrb[0].mxu0
    %v603 = vadd.f32 0.0, %v602
    %v604 = vpop.f32.mrb[0].mxu0
    %605 = vmatprep.mubr.bf16.mxu0 0
    %606 = vmatmul.mubr.bf16.gmra.mrb[0].mxu0 %v274
    %v607 = vpop.f32.mrb[0].mxu0
    %v608 = vadd.f32 0.0, %v607
    %v609 = vpop.f32.mrb[0].mxu0
    %v610 = vpop.f32.mrb[0].mxu0
    %v611 = vadd.f32 0.0, %v610
    %v612 = vpop.f32.mrb[0].mxu0
    %613 = vdwg.mxu0
    %v614 = vpack.c.bf16 %v377, %v374
    %v615 = vpack.c.bf16 %v385, %v382
    %v616 = vpack.c.bf16 %v490, %v487
    %v617 = vpack.c.bf16 %v498, %v495
    %618 = vmatprep.subr.bf16.mxu0 0
    %619 = vmatpush1.bf16.xpose.msra.mxu0 %v616
    %620 = vmatprep.subr.bf16.mxu0 0
    %621 = vmatpush1.bf16.xpose.msra.mxu0 0
    %622 = vmatprep.subr.bf16.mxu0 0
    %623 = vmatpush1.bf16.xpose.msra.mxu0 0
    %624 = vmatprep.subr.bf16.mxu0 0
    %625 = vmatpush1.bf16.xpose.msra.mxu0 0
    %626 = vmatprep.subr.bf16.mxu0 0
    %627 = vmatpush1.bf16.xpose.msra.mxu0 0
    %628 = vmatprep.subr.bf16.mxu0 0
    %629 = vmatpush1.bf16.xpose.msra.mxu0 0
    %630 = vmatprep.subr.bf16.mxu0 0
    %631 = vmatpush1.bf16.xpose.msra.mxu0 0
    %632 = vmatprep.subr.bf16.mxu0 0
    %633 = vmatpush1.bf16.xpose.msra.mxu0 0
    %634 = vmatprep.subr.bf16.mxu0 0
    %635 = vmatpush1.bf16.xpose.msra.mxu0 0
    %636 = vmatprep.subr.bf16.mxu0 0
    %637 = vmatpush1.bf16.xpose.msra.mxu0 0
    %638 = vmatprep.subr.bf16.mxu0 0
    %639 = vmatpush1.bf16.xpose.msra.mxu0 0
    %640 = vmatprep.subr.bf16.mxu0 0
    %641 = vmatpush1.bf16.xpose.msra.mxu0 0
    %642 = vmatprep.subr.bf16.mxu0 0
    %643 = vmatpush1.bf16.xpose.msra.mxu0 0
    %644 = vmatprep.subr.bf16.mxu0 0
    %645 = vmatpush1.bf16.xpose.msra.mxu0 0
    %646 = vmatprep.subr.bf16.mxu0 0
    %647 = vmatpush1.bf16.xpose.msra.mxu0 0
    %648 = vmatprep.subr.bf16.mxu0 0
    %649 = vmatpush1.bf16.xpose.msra.mxu0 0
    %650 = vmatprep.mubr.bf16.mxu0 0
    %651 = vmatmul.mubr.bf16.gmra.mrb[0].mxu0 %v614
    %v652 = vpop.f32.mrb[0].mxu0
    %v653 = vadd.f32 0.0, %v652
    %v654 = vpop.f32.mrb[0].mxu0
    %v655 = vpop.f32.mrb[0].mxu0
    %v656 = vadd.f32 0.0, %v655
    %v657 = vpop.f32.mrb[0].mxu0
    %658 = vdwg.mxu0
    %659 = vmatprep.subr.bf16.mxu0 0
    %660 = vmatpush1.bf16.xpose.msra.mxu0 %v617
    %661 = vmatprep.subr.bf16.mxu0 0
    %662 = vmatpush1.bf16.xpose.msra.mxu0 0
    %663 = vmatprep.subr.bf16.mxu0 0
    %664 = vmatpush1.bf16.xpose.msra.mxu0 0
    %665 = vmatprep.subr.bf16.mxu0 0
    %666 = vmatpush1.bf16.xpose.msra.mxu0 0
    %667 = vmatprep.subr.bf16.mxu0 0
    %668 = vmatpush1.bf16.xpose.msra.mxu0 0
    %669 = vmatprep.subr.bf16.mxu0 0
    %670 = vmatpush1.bf16.xpose.msra.mxu0 0
    %671 = vmatprep.subr.bf16.mxu0 0
    %672 = vmatpush1.bf16.xpose.msra.mxu0 0
    %673 = vmatprep.subr.bf16.mxu0 0
    %674 = vmatpush1.bf16.xpose.msra.mxu0 0
    %675 = vmatprep.subr.bf16.mxu0 0
    %676 = vmatpush1.bf16.xpose.msra.mxu0 0
    %677 = vmatprep.subr.bf16.mxu0 0
    %678 = vmatpush1.bf16.xpose.msra.mxu0 0
    %679 = vmatprep.subr.bf16.mxu0 0
    %680 = vmatpush1.bf16.xpose.msra.mxu0 0
    %681 = vmatprep.subr.bf16.mxu0 0
    %682 = vmatpush1.bf16.xpose.msra.mxu0 0
    %683 = vmatprep.subr.bf16.mxu0 0
    %684 = vmatpush1.bf16.xpose.msra.mxu0 0
    %685 = vmatprep.subr.bf16.mxu0 0
    %686 = vmatpush1.bf16.xpose.msra.mxu0 0
    %687 = vmatprep.subr.bf16.mxu0 0
    %688 = vmatpush1.bf16.xpose.msra.mxu0 0
    %689 = vmatprep.subr.bf16.mxu0 0
    %690 = vmatpush1.bf16.xpose.msra.mxu0 0
    %691 = vmatprep.mubr.bf16.mxu0 0
    %692 = vmatmul.mubr.bf16.gmra.mrb[0].mxu0 %v615
    %v693 = vpop.f32.mrb[0].mxu0
    %v694 = vadd.f32 0.0, %v693
    %v695 = vpop.f32.mrb[0].mxu0
    %v696 = vpop.f32.mrb[0].mxu0
    %v697 = vadd.f32 0.0, %v696
    %v698 = vpop.f32.mrb[0].mxu0
    %699 = vdwg.mxu0
    %v700 = vmul.f32 %v653, 0.088388346
    %v701 = vmul.f32 %v656, 0.088388346
    %v702 = vmul.f32 %v694, 0.088388346
    %v703 = vmul.f32 %v697, 0.088388346
    %v704 = vld [vmem:[%s1] sm:$0x3]
    %v707 = vunpack.c.l.s4 1966171168
    %v708 = vunpack.c.0.s8 %v707
    %v709 = vlaneseq
    %v710 = vshrl.u32 %v709, 7
    %v711 = vsub.s32 %v708, %v710
    %v712 = vrot.slane %v704, %v711
    %v713 = vcombine.high %v712, %v712
    %v715 = vunpack.c.l.s4 1966171168
    %v716 = vunpack.c.0.s8 %v715
    %v717 = vlaneseq
    %v718 = vshrl.u32 %v717, 7
    %v719 = vsub.s32 %v716, %v718
    %v720 = vrot.slane %v712, %v719
    %v722 = vunpack.c.l.s4 1966171168
    %v723 = vunpack.c.0.s8 %v722
    %v724 = vlaneseq
    %v725 = vshrl.u32 %v724, 7
    %v726 = vsub.s32 %v723, %v725
    %v727 = vrot.slane %v713, %v726
    %v728 = vlaneseq
    %v729 = vshrl.u32 %v728, 7
    %v730 = vsub.s32 0, %v729
    %v731 = vrot.slane %v720, %v730
    %v732 = vlaneseq
    %v733 = vshrl.u32 %v732, 7
    %v734 = vsub.s32 0, %v733
    %v735 = vrot.slane %v727, %v734
    %v738 = vadd.f32 %v700, %v731
    %v739 = vadd.f32 %v701, %v731
    %v740 = vadd.f32 %v702, %v735
    %v741 = vadd.f32 %v703, %v735
    %vm742 = vcmask 130048
    %v743 = vsel %vm742, %v738, -inf
    %744 = vmax.xlane.f32.xlu0 %v743
    %v745 = vpop.xlane.xlu0 %744
    %v746 = vsel %vm742, %v739, -inf
    %747 = vmax.xlane.f32.xlu0 %v746
    %v748 = vpop.xlane.xlu0 %747
    %v749 = vsel %vm742, %v740, -inf
    %750 = vmax.xlane.f32.xlu0 %v749
    %v751 = vpop.xlane.xlu0 %750
    %v752 = vsel %vm742, %v741, -inf
    %753 = vmax.xlane.f32.xlu0 %v752
    %v754 = vpop.xlane.xlu0 %753
    %v755 = vsub.f32 %v738, %v745
    %v756 = vsub.f32 %v739, %v748
    %v757 = vsub.f32 %v740, %v751
    %v758 = vsub.f32 %v741, %v754
    %v759 = vmul.f32 %v755, 1.442695
    %v760 = vpow.pop %v759
    %v761 = vmul.f32 %v756, 1.442695
    %v762 = vpow.pop %v761
    %v763 = vmul.f32 %v757, 1.442695
    %v764 = vpow.pop %v763
    %v765 = vmul.f32 %v758, 1.442695
    %v766 = vpow.pop %v765
    %v767 = vsel %vm742, %v760, 0.0
    %768 = vadd.xlane.f32.xlu0 %v767
    %v769 = vpop.xlane.xlu0 %768
    %v770 = vsel %vm742, %v762, 0.0
    %771 = vadd.xlane.f32.xlu0 %v770
    %v772 = vpop.xlane.xlu0 %771
    %v773 = vsel %vm742, %v764, 0.0
    %774 = vadd.xlane.f32.xlu0 %v773
    %v775 = vpop.xlane.xlu0 %774
    %v776 = vsel %vm742, %v766, 0.0
    %777 = vadd.xlane.f32.xlu0 %v776
    %v778 = vpop.xlane.xlu0 %777
    %v779 = vrcp.pop %v769
    %v780 = vrcp.pop %v772
    %v781 = vrcp.pop %v775
    %v782 = vrcp.pop %v778
    %v783 = vmul.f32 %v760, %v779
    %v784 = vmul.f32 %v762, %v780
    %v785 = vmul.f32 %v764, %v781
    %v786 = vmul.f32 %v766, %v782
    %v787 = vpack.c.bf16 %v784, %v783
    %v788 = vpack.c.bf16 %v786, %v785
    %v789 = vpack.c.bf16 %v603, %v600
    %v790 = vpack.c.bf16 %v611, %v608
    %v792 = vsel %vm742, %v787, 0
    %794 = vmatprep.subr.bf16.mxu0 0
    %795 = vmatpush1.bf16.msra.mxu0 %v789
    %796 = vmatprep.subr.bf16.mxu0 0
    %797 = vmatpush1.bf16.msra.mxu0 0
    %798 = vmatprep.subr.bf16.mxu0 0
    %799 = vmatpush1.bf16.msra.mxu0 0
    %800 = vmatprep.subr.bf16.mxu0 0
    %801 = vmatpush1.bf16.msra.mxu0 0
    %802 = vmatprep.subr.bf16.mxu0 0
    %803 = vmatpush1.bf16.msra.mxu0 0
    %804 = vmatprep.subr.bf16.mxu0 0
    %805 = vmatpush1.bf16.msra.mxu0 0
    %806 = vmatprep.subr.bf16.mxu0 0
    %807 = vmatpush1.bf16.msra.mxu0 0
    %808 = vmatprep.subr.bf16.mxu0 0
    %809 = vmatpush1.bf16.msra.mxu0 0
    %810 = vmatprep.subr.bf16.mxu0 0
    %811 = vmatpush1.bf16.msra.mxu0 0
    %812 = vmatprep.subr.bf16.mxu0 0
    %813 = vmatpush1.bf16.msra.mxu0 0
    %814 = vmatprep.subr.bf16.mxu0 0
    %815 = vmatpush1.bf16.msra.mxu0 0
    %816 = vmatprep.subr.bf16.mxu0 0
    %817 = vmatpush1.bf16.msra.mxu0 0
    %818 = vmatprep.subr.bf16.mxu0 0
    %819 = vmatpush1.bf16.msra.mxu0 0
    %820 = vmatprep.subr.bf16.mxu0 0
    %821 = vmatpush1.bf16.msra.mxu0 0
    %822 = vmatprep.subr.bf16.mxu0 0
    %823 = vmatpush1.bf16.msra.mxu0 0
    %824 = vmatprep.subr.bf16.mxu0 0
    %825 = vmatpush1.bf16.msra.mxu0 0
    %826 = vmatprep.mubr.bf16.mxu0 0
    %827 = vmatmul.mubr.bf16.gmra.mrb[0].mxu0 %v792
    %v828 = vpop.f32.mrb[0].mxu0
    %v829 = vadd.f32 0.0, %v828
    %v830 = vpop.f32.mrb[0].mxu0
    %v831 = vpop.f32.mrb[0].mxu0
    %v832 = vadd.f32 0.0, %v831
    %v833 = vpop.f32.mrb[0].mxu0
    %834 = vdwg.mxu0
    %v836 = vsel %vm742, %v788, 0
    %838 = vmatprep.subr.bf16.mxu0 0
    %839 = vmatpush1.bf16.msra.mxu0 %v790
    %840 = vmatprep.subr.bf16.mxu0 0
    %841 = vmatpush1.bf16.msra.mxu0 0
    %842 = vmatprep.subr.bf16.mxu0 0
    %843 = vmatpush1.bf16.msra.mxu0 0
    %844 = vmatprep.subr.bf16.mxu0 0
    %845 = vmatpush1.bf16.msra.mxu0 0
    %846 = vmatprep.subr.bf16.mxu0 0
    %847 = vmatpush1.bf16.msra.mxu0 0
    %848 = vmatprep.subr.bf16.mxu0 0
    %849 = vmatpush1.bf16.msra.mxu0 0
    %850 = vmatprep.subr.bf16.mxu0 0
    %851 = vmatpush1.bf16.msra.mxu0 0
    %852 = vmatprep.subr.bf16.mxu0 0
    %853 = vmatpush1.bf16.msra.mxu0 0
    %854 = vmatprep.subr.bf16.mxu0 0
    %855 = vmatpush1.bf16.msra.mxu0 0
    %856 = vmatprep.subr.bf16.mxu0 0
    %857 = vmatpush1.bf16.msra.mxu0 0
    %858 = vmatprep.subr.bf16.mxu0 0
    %859 = vmatpush1.bf16.msra.mxu0 0
    %860 = vmatprep.subr.bf16.mxu0 0
    %861 = vmatpush1.bf16.msra.mxu0 0
    %862 = vmatprep.subr.bf16.mxu0 0
    %863 = vmatpush1.bf16.msra.mxu0 0
    %864 = vmatprep.subr.bf16.mxu0 0
    %865 = vmatpush1.bf16.msra.mxu0 0
    %866 = vmatprep.subr.bf16.mxu0 0
    %867 = vmatpush1.bf16.msra.mxu0 0
    %868 = vmatprep.subr.bf16.mxu0 0
    %869 = vmatpush1.bf16.msra.mxu0 0
    %870 = vmatprep.mubr.bf16.mxu0 0
    %871 = vmatmul.mubr.bf16.gmra.mrb[0].mxu0 %v836
    %v872 = vpop.f32.mrb[0].mxu0
    %v873 = vadd.f32 0.0, %v872
    %v874 = vpop.f32.mrb[0].mxu0
    %v875 = vpop.f32.mrb[0].mxu0
    %v876 = vadd.f32 0.0, %v875
    %v877 = vpop.f32.mrb[0].mxu0
    %878 = vdwg.mxu0
    %v879 = vpack.c.bf16 %v832, %v829
    %v880 = vpack.c.bf16 %v876, %v873
    %v881 = vld [vmem:[#allocation11] sm:$0xf]
    %v882 = vld [vmem:[#allocation11 + $0x4] sm:$0xf]
    %v883 = vld [vmem:[#allocation11 + $0x8] sm:$0xf]
    %v884 = vld [vmem:[#allocation11 + $0xc] sm:$0xf]
    %v885 = vld [vmem:[#allocation11 + $0x10] sm:$0xf]
    %v886 = vld [vmem:[#allocation11 + $0x14] sm:$0xf]
    %v887 = vld [vmem:[#allocation11 + $0x18] sm:$0xf]
    %v888 = vld [vmem:[#allocation11 + $0x1c] sm:$0xf]
    %v889 = vld [vmem:[#allocation11 + $0x20] sm:$0xf]
    %v890 = vld [vmem:[#allocation11 + $0x24] sm:$0xf]
    %v891 = vld [vmem:[#allocation11 + $0x28] sm:$0xf]
    %v892 = vld [vmem:[#allocation11 + $0x2c] sm:$0xf]
    %v893 = vld [vmem:[#allocation11 + $0x30] sm:$0xf]
    %v894 = vld [vmem:[#allocation11 + $0x34] sm:$0xf]
    %v895 = vld [vmem:[#allocation11 + $0x38] sm:$0xf]
    %v896 = vld [vmem:[#allocation11 + $0x3c] sm:$0xf]
    %v913 = vunpack.c.l.b16 %v881
    %v914 = vunpack.c.l.b16 %v882
    %v915 = vunpack.c.l.b16 %v883
    %v916 = vunpack.c.l.b16 %v884
    %v917 = vunpack.c.l.b16 %v885
    %v918 = vunpack.c.l.b16 %v886
    %v919 = vunpack.c.l.b16 %v887
    %v920 = vunpack.c.l.b16 %v888
    %v921 = vunpack.c.l.b16 %v889
    %v922 = vunpack.c.l.b16 %v890
    %v923 = vunpack.c.l.b16 %v891
    %v924 = vunpack.c.l.b16 %v892
    %v925 = vunpack.c.l.b16 %v893
    %v926 = vunpack.c.l.b16 %v894
    %v927 = vunpack.c.l.b16 %v895
    %v928 = vunpack.c.l.b16 %v896
    %v929 = vpack.c.b16 %v914, %v913
    %v930 = vpack.c.b16 %v916, %v915
    %v931 = vpack.c.b16 %v918, %v917
    %v932 = vpack.c.b16 %v920, %v919
    %v933 = vpack.c.b16 %v922, %v921
    %v934 = vpack.c.b16 %v924, %v923
    %v935 = vpack.c.b16 %v926, %v925
    %v936 = vpack.c.b16 %v928, %v927
    %945 = vmatprep.subr.bf16.mxu0 0
    %946 = vmatpush1.bf16.msra.mxu0 %v929
    %947 = vmatprep.subr.bf16.mxu0 0
    %948 = vmatpush1.bf16.msra.mxu0 %v930
    %949 = vmatprep.subr.bf16.mxu0 0
    %950 = vmatpush1.bf16.msra.mxu0 %v931
    %951 = vmatprep.subr.bf16.mxu0 0
    %952 = vmatpush1.bf16.msra.mxu0 %v932
    %953 = vmatprep.subr.bf16.mxu0 0
    %954 = vmatpush1.bf16.msra.mxu0 %v933
    %955 = vmatprep.subr.bf16.mxu0 0
    %956 = vmatpush1.bf16.msra.mxu0 %v934
    %957 = vmatprep.subr.bf16.mxu0 0
    %958 = vmatpush1.bf16.msra.mxu0 %v935
    %959 = vmatprep.subr.bf16.mxu0 0
    %960 = vmatpush1.bf16.msra.mxu0 %v936
    %961 = vmatprep.subr.bf16.mxu0 0
    %962 = vmatpush1.bf16.msra.mxu0 0
    %963 = vmatprep.subr.bf16.mxu0 0
    %964 = vmatpush1.bf16.msra.mxu0 0
    %965 = vmatprep.subr.bf16.mxu0 0
    %966 = vmatpush1.bf16.msra.mxu0 0
    %967 = vmatprep.subr.bf16.mxu0 0
    %968 = vmatpush1.bf16.msra.mxu0 0
    %969 = vmatprep.subr.bf16.mxu0 0
    %970 = vmatpush1.bf16.msra.mxu0 0
    %971 = vmatprep.subr.bf16.mxu0 0
    %972 = vmatpush1.bf16.msra.mxu0 0
    %973 = vmatprep.subr.bf16.mxu0 0
    %974 = vmatpush1.bf16.msra.mxu0 0
    %975 = vmatprep.subr.bf16.mxu0 0
    %976 = vmatpush1.bf16.msra.mxu0 0
    %977 = vmatprep.mubr.bf16.mxu0 0
    %978 = vmatmul.mubr.bf16.gmra.mrb[0].mxu0 %v879
    %v979 = vpop.f32.mrb[0].mxu0
    %v980 = vadd.f32 0.0, %v979
    %v981 = vpop.f32.mrb[0].mxu0
    %v982 = vpop.f32.mrb[0].mxu0
    %v983 = vadd.f32 0.0, %v982
    %v984 = vpop.f32.mrb[0].mxu0
    %985 = vmatprep.mubr.bf16.mxu0 0
    %986 = vmatmul.mubr.bf16.gmra.mrb[0].mxu0 %v880
    %v987 = vpop.f32.mrb[0].mxu0
    %v988 = vadd.f32 0.0, %v987
    %v989 = vpop.f32.mrb[0].mxu0
    %v990 = vpop.f32.mrb[0].mxu0
    %v991 = vadd.f32 0.0, %v990
    %v992 = vpop.f32.mrb[0].mxu0
    %993 = vdwg.mxu0
    %v994 = vadd.f32 %v259, %v980
    %v995 = vadd.f32 %v262, %v983
    %v996 = vadd.f32 %v267, %v988
    %v997 = vadd.f32 %v270, %v991
    %v998 = vld [vmem:[%s8] sm:$0x1]
    %v999 = vld [vmem:[%s9] sm:$0x1]
    %1000 = vadd.xlane.f32.xlu0 %v994
    %v1001 = vpop.xlane.xlu0 %1000
    %1002 = vadd.xlane.f32.xlu0 %v995
    %v1003 = vpop.xlane.xlu0 %1002
    %1004 = vadd.xlane.f32.xlu0 %v996
    %v1005 = vpop.xlane.xlu0 %1004
    %1006 = vadd.xlane.f32.xlu0 %v997
    %v1007 = vpop.xlane.xlu0 %1006
    %v1008 = vrcp.pop 128.0
    %v1009 = vmul.f32 %v1001, %v1008
    %v1010 = vmul.f32 %v1003, %v1008
    %v1011 = vmul.f32 %v1005, %v1008
    %v1012 = vmul.f32 %v1007, %v1008
    %v1013 = vsub.f32 %v994, %v1009
    %v1014 = vsub.f32 %v995, %v1010
    %v1015 = vsub.f32 %v996, %v1011
    %v1016 = vsub.f32 %v997, %v1012
    %v1017 = vmul.f32 %v1013, %v1013
    %v1018 = vmul.f32 %v1014, %v1014
    %v1019 = vmul.f32 %v1015, %v1015
    %v1020 = vmul.f32 %v1016, %v1016
    %1021 = vadd.xlane.f32.xlu0 %v1017
    %v1022 = vpop.xlane.xlu0 %1021
    %1023 = vadd.xlane.f32.xlu0 %v1018
    %v1024 = vpop.xlane.xlu0 %1023
    %1025 = vadd.xlane.f32.xlu0 %v1019
    %v1026 = vpop.xlane.xlu0 %1025
    %1027 = vadd.xlane.f32.xlu0 %v1020
    %v1028 = vpop.xlane.xlu0 %1027
    %v1029 = vmul.f32 %v1022, %v1008
    %v1030 = vmul.f32 %v1024, %v1008
    %v1031 = vmul.f32 %v1026, %v1008
    %v1032 = vmul.f32 %v1028, %v1008
    %v1033 = vadd.f32 %v1029, 1e-12
    %v1034 = vadd.f32 %v1030, 1e-12
    %v1035 = vadd.f32 %v1031, 1e-12
    %v1036 = vadd.f32 %v1032, 1e-12
    %v1037 = vrsqrt.pop %v1033
    %v1038 = vrsqrt.pop %v1034
    %v1039 = vrsqrt.pop %v1035
    %v1040 = vrsqrt.pop %v1036
    %v1041 = vmul.f32 %v1013, %v1037
    %v1042 = vmul.f32 %v1014, %v1038
    %v1043 = vmul.f32 %v1015, %v1039
    %v1044 = vmul.f32 %v1016, %v1040
    %v1046 = vlaneseq
    %v1047 = vshrl.u32 %v1046, 7
    %v1048 = vsub.s32 0, %v1047
    %v1049 = vrot.slane %v998, %v1048
    %v1051 = vmul.f32 %v1041, %v1049
    %v1052 = vmul.f32 %v1042, %v1049
    %v1053 = vmul.f32 %v1043, %v1049
    %v1054 = vmul.f32 %v1044, %v1049
    %v1056 = vlaneseq
    %v1057 = vshrl.u32 %v1056, 7
    %v1058 = vsub.s32 0, %v1057
    %v1059 = vrot.slane %v999, %v1058
    %v1061 = vadd.f32 %v1051, %v1059
    %v1062 = vadd.f32 %v1052, %v1059
    %v1063 = vadd.f32 %v1053, %v1059
    %v1064 = vadd.f32 %v1054, %v1059
    %v1065 = vpack.c.bf16 %v1062, %v1061
    %v1066 = vpack.c.bf16 %v1064, %v1063
    %v1067 = vld [vmem:[#allocation13] sm:$0xff]
    %v1068 = vld [vmem:[#allocation13 + $0x8] sm:$0xff]
    %v1069 = vld [vmem:[#allocation13 + $0x10] sm:$0xff]
    %v1070 = vld [vmem:[#allocation13 + $0x18] sm:$0xff]
    %v1071 = vld [vmem:[#allocation13 + $0x20] sm:$0xff]
    %v1072 = vld [vmem:[#allocation13 + $0x28] sm:$0xff]
    %v1073 = vld [vmem:[#allocation13 + $0x30] sm:$0xff]
    %v1074 = vld [vmem:[#allocation13 + $0x38] sm:$0xff]
    %v1075 = vld [vmem:[#allocation13 + $0x40] sm:$0xff]
    %v1076 = vld [vmem:[#allocation13 + $0x48] sm:$0xff]
    %v1077 = vld [vmem:[#allocation13 + $0x50] sm:$0xff]
    %v1078 = vld [vmem:[#allocation13 + $0x58] sm:$0xff]
    %v1079 = vld [vmem:[#allocation13 + $0x60] sm:$0xff]
    %v1080 = vld [vmem:[#allocation13 + $0x68] sm:$0xff]
    %v1081 = vld [vmem:[#allocation13 + $0x70] sm:$0xff]
    %v1082 = vld [vmem:[#allocation13 + $0x78] sm:$0xff]
    %v1083 = vld [vmem:[%s11] sm:$0x3]
    %v1085 = vlaneseq
    %v1086 = vshrl.u32 %v1085, 7
    %v1087 = vsub.s32 0, %v1086
    %v1088 = vrot.slane %v1083, %v1087
    %v1089 = vlaneseq
    %v1090 = vshrl.u32 %v1089, 7
    %v1091 = vsub.s32 1, %v1090
    %v1092 = vrot.slane %v1083, %v1091
    %v1111 = vunpack.c.l.b16 %v1067
    %v1112 = vunpack.c.h.b16 %v1067
    %v1113 = vunpack.c.l.b16 %v1068
    %v1114 = vunpack.c.h.b16 %v1068
    %v1115 = vunpack.c.l.b16 %v1069
    %v1116 = vunpack.c.h.b16 %v1069
    %v1117 = vunpack.c.l.b16 %v1070
    %v1118 = vunpack.c.h.b16 %v1070
    %v1119 = vunpack.c.l.b16 %v1071
    %v1120 = vunpack.c.h.b16 %v1071
    %v1121 = vunpack.c.l.b16 %v1072
    %v1122 = vunpack.c.h.b16 %v1072
    %v1123 = vunpack.c.l.b16 %v1073
    %v1124 = vunpack.c.h.b16 %v1073
    %v1125 = vunpack.c.l.b16 %v1074
    %v1126 = vunpack.c.h.b16 %v1074
    %v1127 = vunpack.c.l.b16 %v1075
    %v1128 = vunpack.c.h.b16 %v1075
    %v1129 = vunpack.c.l.b16 %v1076
    %v1130 = vunpack.c.h.b16 %v1076
    %v1131 = vunpack.c.l.b16 %v1077
    %v1132 = vunpack.c.h.b16 %v1077
    %v1133 = vunpack.c.l.b16 %v1078
    %v1134 = vunpack.c.h.b16 %v1078
    %v1135 = vunpack.c.l.b16 %v1079
    %v1136 = vunpack.c.h.b16 %v1079
    %v1137 = vunpack.c.l.b16 %v1080
    %v1138 = vunpack.c.h.b16 %v1080
    %v1139 = vunpack.c.l.b16 %v1081
    %v1140 = vunpack.c.h.b16 %v1081
    %v1141 = vunpack.c.l.b16 %v1082
    %v1142 = vunpack.c.h.b16 %v1082
    %v1143 = vpack.c.b16 %v1113, %v1111
    %v1144 = vpack.c.b16 %v1114, %v1112
    %v1145 = vpack.c.b16 %v1117, %v1115
    %v1146 = vpack.c.b16 %v1118, %v1116
    %v1147 = vpack.c.b16 %v1121, %v1119
    %v1148 = vpack.c.b16 %v1122, %v1120
    %v1149 = vpack.c.b16 %v1125, %v1123
    %v1150 = vpack.c.b16 %v1126, %v1124
    %v1151 = vpack.c.b16 %v1129, %v1127
    %v1152 = vpack.c.b16 %v1130, %v1128
    %v1153 = vpack.c.b16 %v1133, %v1131
    %v1154 = vpack.c.b16 %v1134, %v1132
    %v1155 = vpack.c.b16 %v1137, %v1135
    %v1156 = vpack.c.b16 %v1138, %v1136
    %v1157 = vpack.c.b16 %v1141, %v1139
    %v1158 = vpack.c.b16 %v1142, %v1140
    %1175 = vmatprep.subr.bf16.mxu0 %v1144
    %1176 = vmatpush1.bf16.msra.mxu0 %v1143
    %1177 = vmatprep.subr.bf16.mxu0 %v1146
    %1178 = vmatpush1.bf16.msra.mxu0 %v1145
    %1179 = vmatprep.subr.bf16.mxu0 %v1148
    %1180 = vmatpush1.bf16.msra.mxu0 %v1147
    %1181 = vmatprep.subr.bf16.mxu0 %v1150
    %1182 = vmatpush1.bf16.msra.mxu0 %v1149
    %1183 = vmatprep.subr.bf16.mxu0 %v1152
    %1184 = vmatpush1.bf16.msra.mxu0 %v1151
    %1185 = vmatprep.subr.bf16.mxu0 %v1154
    %1186 = vmatpush1.bf16.msra.mxu0 %v1153
    %1187 = vmatprep.subr.bf16.mxu0 %v1156
    %1188 = vmatpush1.bf16.msra.mxu0 %v1155
    %1189 = vmatprep.subr.bf16.mxu0 %v1158
    %1190 = vmatpush1.bf16.msra.mxu0 %v1157
    %1191 = vmatprep.subr.bf16.mxu0 0
    %1192 = vmatpush1.bf16.msra.mxu0 0
    %1193 = vmatprep.subr.bf16.mxu0 0
    %1194 = vmatpush1.bf16.msra.mxu0 0
    %1195 = vmatprep.subr.bf16.mxu0 0
    %1196 = vmatpush1.bf16.msra.mxu0 0
    %1197 = vmatprep.subr.bf16.mxu0 0
    %1198 = vmatpush1.bf16.msra.mxu0 0
    %1199 = vmatprep.subr.bf16.mxu0 0
    %1200 = vmatpush1.bf16.msra.mxu0 0
    %1201 = vmatprep.subr.bf16.mxu0 0
    %1202 = vmatpush1.bf16.msra.mxu0 0
    %1203 = vmatprep.subr.bf16.mxu0 0
    %1204 = vmatpush1.bf16.msra.mxu0 0
    %1205 = vmatprep.subr.bf16.mxu0 0
    %1206 = vmatpush1.bf16.msra.mxu0 0
    %1207 = vmatprep.mubr.bf16.mxu0 0
    %1208 = vmatmul.mubr.bf16.gmra.mrb[0].mxu0 %v1065
    %v1209 = vpop.f32.mrb[0].mxu0
    %v1210 = vadd.f32 %v1088, %v1209
    %v1211 = vpop.f32.mrb[0].mxu0
    %v1212 = vadd.f32 %v1092, %v1211
    %v1213 = vpop.f32.mrb[0].mxu0
    %v1214 = vadd.f32 %v1088, %v1213
    %v1215 = vpop.f32.mrb[0].mxu0
    %v1216 = vadd.f32 %v1092, %v1215
    %1217 = vmatprep.mubr.bf16.mxu0 0
    %1218 = vmatmul.mubr.bf16.gmra.mrb[0].mxu0 %v1066
    %v1219 = vpop.f32.mrb[0].mxu0
    %v1220 = vadd.f32 %v1088, %v1219
    %v1221 = vpop.f32.mrb[0].mxu0
    %v1222 = vadd.f32 %v1092, %v1221
    %v1223 = vpop.f32.mrb[0].mxu0
    %v1224 = vadd.f32 %v1088, %v1223
    %v1225 = vpop.f32.mrb[0].mxu0
    %v1226 = vadd.f32 %v1092, %v1225
    %1227 = vdwg.mxu0
    %v1228 = vmax.f32 %v1210, 0.0
    %v1229 = vmax.f32 %v1212, 0.0
    %v1230 = vmax.f32 %v1214, 0.0
    %v1231 = vmax.f32 %v1216, 0.0
    %v1232 = vmax.f32 %v1220, 0.0
    %v1233 = vmax.f32 %v1222, 0.0
    %v1234 = vmax.f32 %v1224, 0.0
    %v1235 = vmax.f32 %v1226, 0.0
    %v1236 = vpack.c.bf16 %v1230, %v1228
    %v1237 = vpack.c.bf16 %v1231, %v1229
    %v1238 = vpack.c.bf16 %v1234, %v1232
    %v1239 = vpack.c.bf16 %v1235, %v1233
    %v1240 = vld [vmem:[#allocation14] sm:$0xf]
    %v1241 = vld [vmem:[#allocation14 + $0x4] sm:$0xf]
    %v1242 = vld [vmem:[#allocation14 + $0x8] sm:$0xf]
    %v1243 = vld [vmem:[#allocation14 + $0xc] sm:$0xf]
    %v1244 = vld [vmem:[#allocation14 + $0x10] sm:$0xf]
    %v1245 = vld [vmem:[#allocation14 + $0x14] sm:$0xf]
    %v1246 = vld [vmem:[#allocation14 + $0x18] sm:$0xf]
    %v1247 = vld [vmem:[#allocation14 + $0x1c] sm:$0xf]
    %v1248 = vld [vmem:[#allocation14 + $0x20] sm:$0xf]
    %v1249 = vld [vmem:[#allocation14 + $0x24] sm:$0xf]
    %v1250 = vld [vmem:[#allocation14 + $0x28] sm:$0xf]
    %v1251 = vld [vmem:[#allocation14 + $0x2c] sm:$0xf]
    %v1252 = vld [vmem:[#allocation14 + $0x30] sm:$0xf]
    %v1253 = vld [vmem:[#allocation14 + $0x34] sm:$0xf]
    %v1254 = vld [vmem:[#allocation14 + $0x38] sm:$0xf]
    %v1255 = vld [vmem:[#allocation14 + $0x3c] sm:$0xf]
    %v1256 = vld [vmem:[#allocation14 + $0x40] sm:$0xf]
    %v1257 = vld [vmem:[#allocation14 + $0x44] sm:$0xf]
    %v1258 = vld [vmem:[#allocation14 + $0x48] sm:$0xf]
    %v1259 = vld [vmem:[#allocation14 + $0x4c] sm:$0xf]
    %v1260 = vld [vmem:[#allocation14 + $0x50] sm:$0xf]
    %v1261 = vld [vmem:[#allocation14 + $0x54] sm:$0xf]
    %v1262 = vld [vmem:[#allocation14 + $0x58] sm:$0xf]
    %v1263 = vld [vmem:[#allocation14 + $0x5c] sm:$0xf]
    %v1264 = vld [vmem:[#allocation14 + $0x60] sm:$0xf]
    %v1265 = vld [vmem:[#allocation14 + $0x64] sm:$0xf]
    %v1266 = vld [vmem:[#allocation14 + $0x68] sm:$0xf]
    %v1267 = vld [vmem:[#allocation14 + $0x6c] sm:$0xf]
    %v1268 = vld [vmem:[#allocation14 + $0x70] sm:$0xf]
    %v1269 = vld [vmem:[#allocation14 + $0x74] sm:$0xf]
    %v1270 = vld [vmem:[#allocation14 + $0x78] sm:$0xf]
    %v1271 = vld [vmem:[#allocation14 + $0x7c] sm:$0xf]
    %v1272 = vld [vmem:[%s13] sm:$0x1]
    %v1274 = vlaneseq
    %v1275 = vshrl.u32 %v1274, 7
    %v1276 = vsub.s32 0, %v1275
    %v1277 = vrot.slane %v1272, %v1276
    %v1311 = vunpack.c.l.b16 %v1240
    %v1312 = vunpack.c.l.b16 %v1241
    %v1313 = vunpack.c.l.b16 %v1242
    %v1314 = vunpack.c.l.b16 %v1243
    %v1315 = vunpack.c.l.b16 %v1244
    %v1316 = vunpack.c.l.b16 %v1245
    %v1317 = vunpack.c.l.b16 %v1246
    %v1318 = vunpack.c.l.b16 %v1247
    %v1319 = vunpack.c.l.b16 %v1248
    %v1320 = vunpack.c.l.b16 %v1249
    %v1321 = vunpack.c.l.b16 %v1250
    %v1322 = vunpack.c.l.b16 %v1251
    %v1323 = vunpack.c.l.b16 %v1252
    %v1324 = vunpack.c.l.b16 %v1253
    %v1325 = vunpack.c.l.b16 %v1254
    %v1326 = vunpack.c.l.b16 %v1255
    %v1327 = vunpack.c.l.b16 %v1256
    %v1328 = vunpack.c.l.b16 %v1257
    %v1329 = vunpack.c.l.b16 %v1258
    %v1330 = vunpack.c.l.b16 %v1259
    %v1331 = vunpack.c.l.b16 %v1260
    %v1332 = vunpack.c.l.b16 %v1261
    %v1333 = vunpack.c.l.b16 %v1262
    %v1334 = vunpack.c.l.b16 %v1263
    %v1335 = vunpack.c.l.b16 %v1264
    %v1336 = vunpack.c.l.b16 %v1265
    %v1337 = vunpack.c.l.b16 %v1266
    %v1338 = vunpack.c.l.b16 %v1267
    %v1339 = vunpack.c.l.b16 %v1268
    %v1340 = vunpack.c.l.b16 %v1269
    %v1341 = vunpack.c.l.b16 %v1270
    %v1342 = vunpack.c.l.b16 %v1271
    %v1343 = vpack.c.b16 %v1312, %v1311
    %v1344 = vpack.c.b16 %v1314, %v1313
    %v1345 = vpack.c.b16 %v1316, %v1315
    %v1346 = vpack.c.b16 %v1318, %v1317
    %v1347 = vpack.c.b16 %v1320, %v1319
    %v1348 = vpack.c.b16 %v1322, %v1321
    %v1349 = vpack.c.b16 %v1324, %v1323
    %v1350 = vpack.c.b16 %v1326, %v1325
    %v1351 = vpack.c.b16 %v1328, %v1327
    %v1352 = vpack.c.b16 %v1330, %v1329
    %v1353 = vpack.c.b16 %v1332, %v1331
    %v1354 = vpack.c.b16 %v1334, %v1333
    %v1355 = vpack.c.b16 %v1336, %v1335
    %v1356 = vpack.c.b16 %v1338, %v1337
    %v1357 = vpack.c.b16 %v1340, %v1339
    %v1358 = vpack.c.b16 %v1342, %v1341
    %1375 = vmatprep.subr.bf16.mxu0 0
    %1376 = vmatpush1.bf16.msra.mxu0 %v1343
    %1377 = vmatprep.subr.bf16.mxu0 0
    %1378 = vmatpush1.bf16.msra.mxu0 %v1344
    %1379 = vmatprep.subr.bf16.mxu0 0
    %1380 = vmatpush1.bf16.msra.mxu0 %v1345
    %1381 = vmatprep.subr.bf16.mxu0 0
    %1382 = vmatpush1.bf16.msra.mxu0 %v1346
    %1383 = vmatprep.subr.bf16.mxu0 0
    %1384 = vmatpush1.bf16.msra.mxu0 %v1347
    %1385 = vmatprep.subr.bf16.mxu0 0
    %1386 = vmatpush1.bf16.msra.mxu0 %v1348
    %1387 = vmatprep.subr.bf16.mxu0 0
    %1388 = vmatpush1.bf16.msra.mxu0 %v1349
    %1389 = vmatprep.subr.bf16.mxu0 0
    %1390 = vmatpush1.bf16.msra.mxu0 %v1350
    %1391 = vmatprep.subr.bf16.mxu0 0
    %1392 = vmatpush1.bf16.msra.mxu0 %v1351
    %1393 = vmatprep.subr.bf16.mxu0 0
    %1394 = vmatpush1.bf16.msra.mxu0 %v1352
    %1395 = vmatprep.subr.bf16.mxu0 0
    %1396 = vmatpush1.bf16.msra.mxu0 %v1353
    %1397 = vmatprep.subr.bf16.mxu0 0
    %1398 = vmatpush1.bf16.msra.mxu0 %v1354
    %1399 = vmatprep.subr.bf16.mxu0 0
    %1400 = vmatpush1.bf16.msra.mxu0 %v1355
    %1401 = vmatprep.subr.bf16.mxu0 0
    %1402 = vmatpush1.bf16.msra.mxu0 %v1356
    %1403 = vmatprep.subr.bf16.mxu0 0
    %1404 = vmatpush1.bf16.msra.mxu0 %v1357
    %1405 = vmatprep.subr.bf16.mxu0 0
    %1406 = vmatpush1.bf16.msra.mxu0 %v1358
    %1407 = vmatprep.mubr.bf16.mxu0 %v1237
    %1408 = vmatmul.mubr.bf16.gmra.mrb[0].mxu0 %v1236
    %v1409 = vpop.f32.mrb[0].mxu0
    %v1410 = vadd.f32 %v1277, %v1409
    %v1411 = vpop.f32.mrb[0].mxu0
    %v1412 = vpop.f32.mrb[0].mxu0
    %v1413 = vadd.f32 %v1277, %v1412
    %v1414 = vpop.f32.mrb[0].mxu0
    %1415 = vmatprep.mubr.bf16.mxu0 %v1239
    %1416 = vmatmul.mubr.bf16.gmra.mrb[0].mxu0 %v1238
    %v1417 = vpop.f32.mrb[0].mxu0
    %v1418 = vadd.f32 %v1277, %v1417
    %v1419 = vpop.f32.mrb[0].mxu0
    %v1420 = vpop.f32.mrb[0].mxu0
    %v1421 = vadd.f32 %v1277, %v1420
    %v1422 = vpop.f32.mrb[0].mxu0
    %1423 = vdwg.mxu0
    %v1424 = vadd.f32 %v1061, %v1410
    %v1425 = vadd.f32 %v1062, %v1413
    %v1426 = vadd.f32 %v1063, %v1418
    %v1427 = vadd.f32 %v1064, %v1421
    %v1428 = vld [vmem:[%s14] sm:$0x1]
    %v1429 = vld [vmem:[%s15] sm:$0x1]
    %1430 = vadd.xlane.f32.xlu0 %v1424
    %v1431 = vpop.xlane.xlu0 %1430
    %1432 = vadd.xlane.f32.xlu0 %v1425
    %v1433 = vpop.xlane.xlu0 %1432
    %1434 = vadd.xlane.f32.xlu0 %v1426
    %v1435 = vpop.xlane.xlu0 %1434
    %1436 = vadd.xlane.f32.xlu0 %v1427
    %v1437 = vpop.xlane.xlu0 %1436
    %v1438 = vmul.f32 %v1431, %v1008
    %v1439 = vmul.f32 %v1433, %v1008
    %v1440 = vmul.f32 %v1435, %v1008
    %v1441 = vmul.f32 %v1437, %v1008
    %v1442 = vsub.f32 %v1424, %v1438
    %v1443 = vsub.f32 %v1425, %v1439
    %v1444 = vsub.f32 %v1426, %v1440
    %v1445 = vsub.f32 %v1427, %v1441
    %v1446 = vmul.f32 %v1442, %v1442
    %v1447 = vmul.f32 %v1443, %v1443
    %v1448 = vmul.f32 %v1444, %v1444
    %v1449 = vmul.f32 %v1445, %v1445
    %1450 = vadd.xlane.f32.xlu0 %v1446
    %v1451 = vpop.xlane.xlu0 %1450
    %1452 = vadd.xlane.f32.xlu0 %v1447
    %v1453 = vpop.xlane.xlu0 %1452
    %1454 = vadd.xlane.f32.xlu0 %v1448
    %v1455 = vpop.xlane.xlu0 %1454
    %1456 = vadd.xlane.f32.xlu0 %v1449
    %v1457 = vpop.xlane.xlu0 %1456
    %v1458 = vmul.f32 %v1451, %v1008
    %v1459 = vmul.f32 %v1453, %v1008
    %v1460 = vmul.f32 %v1455, %v1008
    %v1461 = vmul.f32 %v1457, %v1008
    %v1462 = vadd.f32 %v1458, 1e-12
    %v1463 = vadd.f32 %v1459, 1e-12
    %v1464 = vadd.f32 %v1460, 1e-12
    %v1465 = vadd.f32 %v1461, 1e-12
    %v1466 = vrsqrt.pop %v1462
    %v1467 = vrsqrt.pop %v1463
    %v1468 = vrsqrt.pop %v1464
    %v1469 = vrsqrt.pop %v1465
    %v1470 = vmul.f32 %v1442, %v1466
    %v1471 = vmul.f32 %v1443, %v1467
    %v1472 = vmul.f32 %v1444, %v1468
    %v1473 = vmul.f32 %v1445, %v1469
    %v1475 = vlaneseq
    %v1476 = vshrl.u32 %v1475, 7
    %v1477 = vsub.s32 0, %v1476
    %v1478 = vrot.slane %v1428, %v1477
    %v1480 = vmul.f32 %v1470, %v1478
    %v1481 = vmul.f32 %v1471, %v1478
    %v1482 = vmul.f32 %v1472, %v1478
    %v1483 = vmul.f32 %v1473, %v1478
    %v1485 = vlaneseq
    %v1486 = vshrl.u32 %v1485, 7
    %v1487 = vsub.s32 0, %v1486
    %v1488 = vrot.slane %v1429, %v1487
    %v1490 = vadd.f32 %v1480, %v1488
    %v1491 = vadd.f32 %v1481, %v1488
    %v1492 = vadd.f32 %v1482, %v1488
    %v1493 = vadd.f32 %v1483, %v1488
    %1494 = vst [vmem:[#allocation16] sm:$0xff] %v1490
    %1495 = vst [vmem:[#allocation16 + $0x8] sm:$0xff] %v1491
    %1496 = vst [vmem:[#allocation16 + $0x10] sm:$0xff] %v1492
    %1497 = vst [vmem:[#allocation16 + $0x18] sm:$0xff] %v1493
    // Predicated region
    $region98: #{tpu_custom_call.1} parent=1 // pred_check
      _
    $region99: #{tpu_custom_call.1} parent=1 // pred_check_branch
      %1499 = sbr.rel (0) target = $region101
    $region100: #{tpu_custom_call.1} parent=1 // pred_region
      %s1501 = ssub.s32 512, 512
      %1502 = vsyncadd [#allocation4], %s1501
      %s1503 = sshll.u32 [#allocation16], 4
      %s1504 = int_to_ptr.vmem [resolvable:$true] %s1503
      %1509 = dma.vmem_to_hbm [thread:$0]  %s1504, 512, %s16, [#allocation4], 128, 128, 8
    $region101: #{tpu_custom_call.1} parent=1 // pred_fallthru
      _
    // Predicated region
    $region102: #{tpu_custom_call.1} parent=1 // pred_check
      _
    $region103: #{tpu_custom_call.1} parent=1 // pred_check_branch
      %1511 = sbr.rel (0) target = $region105
    $region104: #{tpu_custom_call.1} parent=1 // pred_region
      %1512 = dma.done [#allocation4], 512
    $region105: #{tpu_custom_call.1} parent=1 // pred_fallthru
      _
    %1513 = vsyncpa [#allocation3], 1
    %1514 = vsyncpa [#allocation6], 1
    %1515 = vsyncpa [#allocation9], 1
    %1516 = vsyncpa [#allocation12], 1
    %1517 = vsyncpa [#allocation15], 1
    %1518 = vsyncpa [#allocation4], 1

</llo_original>
